<compile_context>
chip_gen: v7x
topology: tpu7x:2x2x1
jax: 0.10.0
libtpu: 0.0.40
codegen_flags: <defaults>
</compile_context>

<pallas_src>
import functools

import jax
import jax.numpy as jnp
from jax.experimental import pallas as pl
from jax.experimental.pallas import tpu as pltpu

DROPOUT_RATE = 0.5  # stands in for the interactive input() in the PyTorch file
EPS = 1e-5


# --------------------------------------------------------------------------- kernel
def _bottleneck_kernel(x_ref, w1_ref, b1_ref, w2_ref, b2_ref, w3_ref, b3_ref,
                       *rest, stride):
    """Fully fused ShuffleNet bottleneck forward (inference), one image/step."""
    if stride == 1:
        o_ref, hpad_ref = rest
        xpad_ref = None
    else:
        oc_ref, op_ref, hpad_ref, xpad_ref = rest

    H, W, Cin = x_ref.shape
    mid = w1_ref.shape[1]
    Ho, Wo = H // stride, W // stride

    x = x_ref[...]
    x2 = x.reshape(H * W, Cin)

    # ---- conv1x1_1 (grouped -> dense block-diag; BN scale + channel shuffle
    #      folded into w1 columns) + bias + ReLU.
    h = jnp.maximum(
        jnp.dot(x2, w1_ref[...], preferred_element_type=jnp.float32) + b1_ref[...],
        0.0)
    h3 = h.reshape(H, W, mid)

    # ---- static tap slices into the zero-bordered halo scratch.
    if stride == 1:
        row_sl = [(dh, dh + H) for dh in range(3)]          # rows oh + dh - 1
        col_sl = [(dw, dw + W) for dw in range(3)]
    else:
        # scratch rows/cols laid out as [zero | odd | even] (input arrives
        # even-first permuted), so rows 2*oh + dh - 1 are contiguous slices.
        row_sl = [(0, Ho), (Ho + 1, 2 * Ho + 1), (1, Ho + 1)]
        col_sl = [(0, Wo), (Wo + 1, 2 * Wo + 1), (1, Wo + 1)]

    def pad_into(scr_ref, v):
        # Zero ONLY the 1-wide border the taps can read; interior is fully
        # overwritten every grid step (do not zero the whole buffer).
        Hp, Wp, C = scr_ref.shape
        zrow = jnp.zeros((1, Wp, C), jnp.float32)
        zcol = jnp.zeros((Hp, 1, C), jnp.float32)
        scr_ref[0:1, :, :] = zrow
        scr_ref[:, 0:1, :] = zcol
        if stride == 1:
            scr_ref[Hp - 1:Hp, :, :] = zrow
            scr_ref[:, Wp - 1:Wp, :] = zcol
            scr_ref[1:H + 1, 1:W + 1, :] = v
        else:
            scr_ref[1:Ho + 1, 1:Wo + 1, :] = v[Ho:, Wo:, :]   # odd rows, odd cols
            scr_ref[1:Ho + 1, Wo + 1:, :] = v[Ho:, :Wo, :]    # odd rows, even cols
            scr_ref[Ho + 1:, 1:Wo + 1, :] = v[:Ho, Wo:, :]    # even rows, odd cols
            scr_ref[Ho + 1:, Wo + 1:, :] = v[:Ho, :Wo, :]     # even rows, even cols
        return scr_ref[...]

    def conv3x3_taps(vp, tapw):
        acc = None
        k = 0
        for (r0, r1) in row_sl:
            for (c0, c1) in col_sl:
                t = vp[r0:r1, c0:c1, :]
                if tapw is not None:
                    t = t * tapw[k]
                acc = t if acc is None else acc + t
                k += 1
        return acc

    # ---- depthwise 3x3 (BN scale folded into the 9 tap rows) + bias + ReLU.
    w2 = w2_ref[...]
    tapw = [w2[k:k + 1, :].reshape(1, 1, mid) for k in range(9)]   # hoisted
    y = conv3x3_taps(pad_into(hpad_ref, h3), tapw)
    y = jnp.maximum(y + b2_ref[...], 0.0)
    # TODO(synk): nn.Dropout is identity at inference; training-mode Bernoulli
    # masking is not implemented.
    y2 = y.reshape(Ho * Wo, mid)

    # ---- conv1x1_3 (dense block-diag, BN scale folded) -- one flat MXU dot.
    z = jnp.dot(y2, w3_ref[...], preferred_element_type=jnp.float32) + b3_ref[...]

    if stride == 1:
        # identity shortcut + final ReLU, single store.
        o_ref[...] = jnp.maximum(z + x2, 0.0).astype(o_ref.dtype)
    else:
        oc_ref[...] = jnp.maximum(z, 0.0).astype(oc_ref.dtype)
        # AvgPool2d(3, stride=2, padding=1) shortcut (count_include_pad=True),
        # written as a separate narrow output (wrapper concatenates channels).
        pool = conv3x3_taps(pad_into(xpad_ref, x), None) * (1.0 / 9.0)
        op_ref[...] = jnp.maximum(pool.reshape(Ho * Wo, Cin), 0.0).astype(op_ref.dtype)


# --------------------------------------------------------------------------- glue
def bn_fold(gamma, beta, mean, var):
    scale = gamma / jnp.sqrt(var + EPS)
    return scale, beta - mean * scale


def grouped_1x1_dense(w, g):
    """PyTorch grouped 1x1 weight [Cout, Cin//g] -> dense block-diag [Cin, Cout]."""
    cout, cing = w.shape
    cin, coutg = cing * g, cout // g
    dense = jnp.zeros((cin, cout), jnp.float32)
    for i in range(g):
        dense = dense.at[i * cing:(i + 1) * cing, i * coutg:(i + 1) * coutg].set(
            w[i * coutg:(i + 1) * coutg, :].T)
    return dense


def channel_shuffle(x_nhwc, g):   # used by the pure-JAX reference only
    N, H, W, C = x_nhwc.shape
    return x_nhwc.reshape(N, H, W, g, C // g).swapaxes(-1, -2).reshape(N, H, W, C)


def _const_spec(a):
    nd = a.ndim
    return pl.BlockSpec(a.shape, lambda n, _d=nd: (0,) * _d)


def bottleneck_forward(x_nchw, p, stride, groups):
    N, Cin, H, W = x_nchw.shape
    if stride == 2:
        assert H % 2 == 0 and W % 2 == 0, "stride-2 path assumes even H/W"
    g1, mid = p["g1"], p["mid"]
    Ho, Wo = H // stride, W // stride

    x = jnp.transpose(x_nchw, (0, 2, 3, 1)).astype(jnp.float32)          # NHWC
    if stride == 2:
        # even-first spatial permutation via reshape/transpose (no gather):
        # the kernel then computes only stride-2 output pixels with static slices.
        x = x.reshape(N, H // 2, 2, W, Cin).transpose(0, 2, 1, 3, 4).reshape(N, H, W, Cin)
        x = x.reshape(N, H, W // 2, 2, Cin).transpose(0, 1, 3, 2, 4).reshape(N, H, W, Cin)

    # trace-time folding: BN -> scale/bias folded into weights, grouped 1x1 ->
    # dense block-diag, channel shuffle -> conv1 column permutation.
    s1, b1 = bn_fold(*p["bn1"])
    s2, b2 = bn_fold(*p["bn2"])
    s3, b3 = bn_fold(*p["bn3"])
    w1d = grouped_1x1_dense(p["w1"], g1)                                 # [Cin, mid]
    j = jnp.arange(mid)
    shuf = (j % g1) * (mid // g1) + j // g1                              # shuffle perm
    w1d = w1d[:, shuf] * s1[shuf][None, :]
    b1f = b1[shuf]
    w2 = p["w2"].reshape(mid, 9).T * s2[None, :]                         # [9, mid]
    w3d = grouped_1x1_dense(p["w3"], groups) * s3[None, :]               # [mid, Cout]
    Cout = w3d.shape[1]
    if stride == 1:
        assert Cin == Cout, "identity shortcut requires Cin == Cout"

    args = (x, w1d, b1f.reshape(1, mid), w2, b2.reshape(1, 1, mid),
            w3d, b3.reshape(1, Cout))

    in_specs = [pl.BlockSpec((None, H, W, Cin), lambda n: (n, 0, 0, 0))] + \
               [_const_spec(a) for a in args[1:]]

    if stride == 1:
        out_shape = jax.ShapeDtypeStruct((N, H * W, Cout), jnp.float32)
        out_specs = pl.BlockSpec((None, H * W, Cout), lambda n: (n, 0, 0))
        scratch = [pltpu.VMEM((H + 2, W + 2, mid), jnp.float32)]
    else:
        out_shape = (jax.ShapeDtypeStruct((N, Ho * Wo, Cout), jnp.float32),
                     jax.ShapeDtypeStruct((N, Ho * Wo, Cin), jnp.float32))
        out_specs = (pl.BlockSpec((None, Ho * Wo, Cout), lambda n: (n, 0, 0)),
                     pl.BlockSpec((None, Ho * Wo, Cin), lambda n: (n, 0, 0)))
        scratch = [pltpu.VMEM((H + 1, W + 1, mid), jnp.float32),
                   pltpu.VMEM((H + 1, W + 1, Cin), jnp.float32)]

    out = pl.pallas_call(
        functools.partial(_bottleneck_kernel, stride=stride),
        out_shape=out_shape,
        grid=(N,),
        in_specs=in_specs,
        out_specs=out_specs,
        scratch_shapes=scratch,
        compiler_params=pltpu.CompilerParams(
            dimension_semantics=("parallel",),
            vmem_limit_bytes=32 * 1024 * 1024),
    )(*args)

    if stride == 1:
        out = out.reshape(N, H, W, Cout)
    else:
        out = jnp.concatenate(out, axis=-1).reshape(N, Ho, Wo, Cout + Cin)
    return jnp.transpose(out, (0, 3, 1, 2))                              # -> NCHW


def make_params(key, cin, cout, groups):
    g1 = 1 if cin == 24 else groups
    mid = cout // 4

    def bn(k, c):
        k1, k2, k3, k4 = jax.random.split(k, 4)
        gamma = 1.0 + 0.1 * jax.random.normal(k1, (c,), jnp.float32)
        beta = 0.1 * jax.random.normal(k2, (c,), jnp.float32)
        mean = 0.1 * jax.random.normal(k3, (c,), jnp.float32)
        var = 0.5 + 0.1 * jnp.abs(jax.random.normal(k4, (c,), jnp.float32))
        return gamma, beta, mean, var

    ks = jax.random.split(key, 6)
    return {
        "g1": g1, "mid": mid,
        "w1": 0.2 * jax.random.normal(ks[0], (mid, cin // g1), jnp.float32),
        "bn1": bn(ks[1], mid),
        "w2": 0.2 * jax.random.normal(ks[2], (mid, 1, 3, 3), jnp.float32),
        "bn2": bn(ks[3], mid),
        "w3": 0.2 * jax.random.normal(ks[4], (cout, mid // groups), jnp.float32),
        "bn3": bn(ks[5], cout),
    }


# --------------------------------------------------------------------------- reference (pure JAX/XLA)
def bottleneck_ref(x_nchw, p, stride, groups):
    x = jnp.transpose(x_nchw, (0, 2, 3, 1))
    dn = ("NHWC", "HWIO", "NHWC")

    def conv1x1(h, w, g):
        rhs = jnp.transpose(w, (1, 0))[None, None]  # [1,1,Cin/g,Cout]
        return jax.lax.conv_general_dilated(h, rhs, (1, 1), "VALID",
                                            dimension_numbers=dn,
                                            feature_group_count=g)

    def bn_apply(h, params):
        gamma, beta, mean, var = params
        return gamma * (h - mean) / jnp.sqrt(var + EPS) + beta

    g1, mid = p["g1"], p["mid"]
    out = jax.nn.relu(bn_apply(conv1x1(x, p["w1"], g1), p["bn1"]))
    out = channel_shuffle(out, g1)
    rhs = jnp.transpose(p["w2"], (2, 3, 1, 0))  # [3,3,1,mid]
    out = jax.lax.conv_general_dilated(out, rhs, (stride, stride),
                                       [(1, 1), (1, 1)], dimension_numbers=dn,
                                       feature_group_count=mid)
    out = jax.nn.relu(bn_apply(out, p["bn2"]))
    out = bn_apply(conv1x1(out, p["w3"], groups), p["bn3"])
    if stride == 2:
        res = jax.lax.reduce_window(x, 0.0, jax.lax.add, (1, 3, 3, 1), (1, 2, 2, 1),
                                    [(0, 0), (1, 1), (1, 1), (0, 0)]) / 9.0
        out = jax.nn.relu(jnp.concatenate([out, res], axis=-1))
    else:
        out = jax.nn.relu(out + x)
    return jnp.transpose(out, (0, 3, 1, 2))


# --------------------------------------------------------------------------- main
if __name__ == "__main__":
    key = jax.random.PRNGKey(0)
    kx, kp1, kp2 = jax.random.split(key, 3)

    N, C, H, W = 2, 16, 16, 16
    x = jax.random.normal(kx, (N, C, H, W), jnp.float32)

    # Case 1: stride=1 (identity shortcut, residual add). in=out=16, groups=4.
    p1 = make_params(kp1, 16, 16, groups=4)
    y1 = bottleneck_forward(x, p1, stride=1, groups=4)
    r1 = bottleneck_ref(x, p1, stride=1, groups=4)

    # Case 2: stride=2 (avg-pool shortcut, channel concat). in=16, out=32, groups=4.
    p2 = make_params(kp2, 16, 32, groups=4)
    y2 = bottleneck_forward(x, p2, stride=2, groups=4)
    r2 = bottleneck_ref(x, p2, stride=2, groups=4)

    jax.block_until_ready((y1, y2))
    assert y1.shape == (N, 16, H, W), y1.shape
    assert y2.shape == (N, 32 + 16, H // 2, W // 2), y2.shape
    assert jnp.allclose(y1, r1, atol=1e-4, rtol=1e-4), float(jnp.max(jnp.abs(y1 - r1)))
    assert jnp.allclose(y2, r2, atol=1e-4, rtol=1e-4), float(jnp.max(jnp.abs(y2 - r2)))
    print("KERNEL_OK")
</pallas_src>

<mosaic_0001>
module attributes {stable_mosaic.version = 11 : i64} {
  func.func @_bottleneck_kernel(%arg0: i32, %arg1: memref<1x16x16x16xf32, #tpu.memory_space<vmem>>, %arg2: memref<16x4xf32, #tpu.memory_space<vmem>>, %arg3: memref<1x4xf32, #tpu.memory_space<vmem>>, %arg4: memref<9x4xf32, #tpu.memory_space<vmem>>, %arg5: memref<1x1x4xf32, #tpu.memory_space<vmem>>, %arg6: memref<4x16xf32, #tpu.memory_space<vmem>>, %arg7: memref<1x16xf32, #tpu.memory_space<vmem>>, %arg8: memref<1x256x16xf32, #tpu.memory_space<vmem>>, %arg9: memref<18x18x4xf32, #tpu.memory_space<vmem>>) attributes {dimension_semantics = [#tpu.dimension_semantics<parallel>], iteration_bounds = array<i64: 2>, scalar_prefetch = 0 : i64, scratch_operands = 1 : i64, tpu.core_type = #tpu.core_type<tc>, window_params = [{transform_indices = @transform_0, window_bounds = array<i64: 1, 16, 16, 16>}, {pipeline_mode = #tpu.pipeline_mode<synchronous>, transform_indices = @transform_1, window_bounds = array<i64: 16, 4>}, {pipeline_mode = #tpu.pipeline_mode<synchronous>, transform_indices = @transform_2, window_bounds = array<i64: 1, 4>}, {pipeline_mode = #tpu.pipeline_mode<synchronous>, transform_indices = @transform_3, window_bounds = array<i64: 9, 4>}, {pipeline_mode = #tpu.pipeline_mode<synchronous>, transform_indices = @transform_4, window_bounds = array<i64: 1, 1, 4>}, {pipeline_mode = #tpu.pipeline_mode<synchronous>, transform_indices = @transform_5, window_bounds = array<i64: 4, 16>}, {pipeline_mode = #tpu.pipeline_mode<synchronous>, transform_indices = @transform_6, window_bounds = array<i64: 1, 16>}, {transform_indices = @transform_7, window_bounds = array<i64: 1, 256, 16>}]} {
    %c0 = arith.constant 0 : index
    %c0_0 = arith.constant 0 : index
    %c0_1 = arith.constant 0 : index
    %c0_2 = arith.constant 0 : index
    %0 = vector.load %arg1[%c0, %c0_0, %c0_1, %c0_2] : memref<1x16x16x16xf32, #tpu.memory_space<vmem>>, vector<1x16x16x16xf32>
    %1 = vector.shape_cast %0 : vector<1x16x16x16xf32> to vector<16x16x16xf32>
    %2 = vector.shape_cast %1 : vector<16x16x16xf32> to vector<256x16xf32>
    %c0_3 = arith.constant 0 : index
    %c0_4 = arith.constant 0 : index
    %3 = vector.load %arg2[%c0_3, %c0_4] : memref<16x4xf32, #tpu.memory_space<vmem>>, vector<16x4xf32>
    %cst = arith.constant dense<0.000000e+00> : vector<256x4xf32>
    %4 = tpu.matmul %2, %3, %cst {dimension_numbers = #tpu.dot_dimension_numbers<[1], [0], [0], [1], [0, 0, 1, 1], [], []>} : vector<256x16xf32>, vector<16x4xf32>, vector<256x4xf32> -> vector<256x4xf32>
    %c0_5 = arith.constant 0 : index
    %c0_6 = arith.constant 0 : index
    %5 = vector.load %arg3[%c0_5, %c0_6] : memref<1x4xf32, #tpu.memory_space<vmem>>, vector<1x4xf32>
    %6 = vector.broadcast %5 : vector<1x4xf32> to vector<256x4xf32>
    %7 = arith.addf %4, %6 : vector<256x4xf32>
    %cst_7 = arith.constant 0.000000e+00 : f32
    %8 = vector.broadcast %cst_7 : f32 to vector<256x4xf32>
    %9 = arith.maximumf %7, %8 : vector<256x4xf32>
    %10 = vector.shape_cast %9 : vector<256x4xf32> to vector<16x16x4xf32>
    %c0_8 = arith.constant 0 : index
    %c0_9 = arith.constant 0 : index
    %11 = vector.load %arg4[%c0_8, %c0_9] : memref<9x4xf32, #tpu.memory_space<vmem>>, vector<9x4xf32>
    %12 = vector.extract_strided_slice %11 {offsets = [0, 0], sizes = [1, 4], strides = [1, 1]} : vector<9x4xf32> to vector<1x4xf32>
    %13 = vector.shape_cast %12 : vector<1x4xf32> to vector<1x1x4xf32>
    %14 = vector.extract_strided_slice %11 {offsets = [1, 0], sizes = [1, 4], strides = [1, 1]} : vector<9x4xf32> to vector<1x4xf32>
    %15 = vector.shape_cast %14 : vector<1x4xf32> to vector<1x1x4xf32>
    %16 = vector.extract_strided_slice %11 {offsets = [2, 0], sizes = [1, 4], strides = [1, 1]} : vector<9x4xf32> to vector<1x4xf32>
    %17 = vector.shape_cast %16 : vector<1x4xf32> to vector<1x1x4xf32>
    %18 = vector.extract_strided_slice %11 {offsets = [3, 0], sizes = [1, 4], strides = [1, 1]} : vector<9x4xf32> to vector<1x4xf32>
    %19 = vector.shape_cast %18 : vector<1x4xf32> to vector<1x1x4xf32>
    %20 = vector.extract_strided_slice %11 {offsets = [4, 0], sizes = [1, 4], strides = [1, 1]} : vector<9x4xf32> to vector<1x4xf32>
    %21 = vector.shape_cast %20 : vector<1x4xf32> to vector<1x1x4xf32>
    %22 = vector.extract_strided_slice %11 {offsets = [5, 0], sizes = [1, 4], strides = [1, 1]} : vector<9x4xf32> to vector<1x4xf32>
    %23 = vector.shape_cast %22 : vector<1x4xf32> to vector<1x1x4xf32>
    %24 = vector.extract_strided_slice %11 {offsets = [6, 0], sizes = [1, 4], strides = [1, 1]} : vector<9x4xf32> to vector<1x4xf32>
    %25 = vector.shape_cast %24 : vector<1x4xf32> to vector<1x1x4xf32>
    %26 = vector.extract_strided_slice %11 {offsets = [7, 0], sizes = [1, 4], strides = [1, 1]} : vector<9x4xf32> to vector<1x4xf32>
    %27 = vector.shape_cast %26 : vector<1x4xf32> to vector<1x1x4xf32>
    %28 = vector.extract_strided_slice %11 {offsets = [8, 0], sizes = [1, 4], strides = [1, 1]} : vector<9x4xf32> to vector<1x4xf32>
    %29 = vector.shape_cast %28 : vector<1x4xf32> to vector<1x1x4xf32>
    %cst_10 = arith.constant 0.000000e+00 : f32
    %30 = vector.broadcast %cst_10 : f32 to vector<1x18x4xf32>
    %cst_11 = arith.constant 0.000000e+00 : f32
    %31 = vector.broadcast %cst_11 : f32 to vector<18x1x4xf32>
    %c0_12 = arith.constant 0 : index
    %c0_13 = arith.constant 0 : index
    %c0_14 = arith.constant 0 : index
    %32 = vector.load %arg9[%c0_12, %c0_13, %c0_14] : memref<18x18x4xf32, #tpu.memory_space<vmem>>, vector<1x18x4xf32>
    tpu.vector_store %arg9[%c0_12, %c0_13, %c0_14], %30 {strides = array<i32>} : memref<18x18x4xf32, #tpu.memory_space<vmem>>, vector<1x18x4xf32>,
    %c0_15 = arith.constant 0 : index
    %c0_16 = arith.constant 0 : index
    %c0_17 = arith.constant 0 : index
    %33 = vector.load %arg9[%c0_15, %c0_16, %c0_17] : memref<18x18x4xf32, #tpu.memory_space<vmem>>, vector<18x1x4xf32>
    tpu.vector_store %arg9[%c0_15, %c0_16, %c0_17], %31 {strides = array<i32>} : memref<18x18x4xf32, #tpu.memory_space<vmem>>, vector<18x1x4xf32>,
    %c17 = arith.constant 17 : index
    %c0_18 = arith.constant 0 : index
    %c0_19 = arith.constant 0 : index
    %34 = vector.load %arg9[%c17, %c0_18, %c0_19] : memref<18x18x4xf32, #tpu.memory_space<vmem>>, vector<1x18x4xf32>
    tpu.vector_store %arg9[%c17, %c0_18, %c0_19], %30 {strides = array<i32>} : memref<18x18x4xf32, #tpu.memory_space<vmem>>, vector<1x18x4xf32>,
    %c0_20 = arith.constant 0 : index
    %c17_21 = arith.constant 17 : index
    %c0_22 = arith.constant 0 : index
    %35 = vector.load %arg9[%c0_20, %c17_21, %c0_22] : memref<18x18x4xf32, #tpu.memory_space<vmem>>, vector<18x1x4xf32>
    tpu.vector_store %arg9[%c0_20, %c17_21, %c0_22], %31 {strides = array<i32>} : memref<18x18x4xf32, #tpu.memory_space<vmem>>, vector<18x1x4xf32>,
    %c1 = arith.constant 1 : index
    %c1_23 = arith.constant 1 : index
    %c0_24 = arith.constant 0 : index
    %36 = vector.load %arg9[%c1, %c1_23, %c0_24] : memref<18x18x4xf32, #tpu.memory_space<vmem>>, vector<16x16x4xf32>
    tpu.vector_store %arg9[%c1, %c1_23, %c0_24], %10 {strides = array<i32>} : memref<18x18x4xf32, #tpu.memory_space<vmem>>, vector<16x16x4xf32>,
    %c0_25 = arith.constant 0 : index
    %c0_26 = arith.constant 0 : index
    %c0_27 = arith.constant 0 : index
    %37 = vector.load %arg9[%c0_25, %c0_26, %c0_27] : memref<18x18x4xf32, #tpu.memory_space<vmem>>, vector<18x18x4xf32>
    %38 = vector.extract_strided_slice %37 {offsets = [0, 0, 0], sizes = [16, 16, 4], strides = [1, 1, 1]} : vector<18x18x4xf32> to vector<16x16x4xf32>
    %39 = vector.broadcast %13 : vector<1x1x4xf32> to vector<16x16x4xf32>
    %40 = arith.mulf %38, %39 : vector<16x16x4xf32>
    %41 = vector.extract_strided_slice %37 {offsets = [0, 1, 0], sizes = [16, 16, 4], strides = [1, 1, 1]} : vector<18x18x4xf32> to vector<16x16x4xf32>
    %42 = vector.broadcast %15 : vector<1x1x4xf32> to vector<16x16x4xf32>
    %43 = arith.mulf %41, %42 : vector<16x16x4xf32>
    %44 = arith.addf %40, %43 : vector<16x16x4xf32>
    %45 = vector.extract_strided_slice %37 {offsets = [0, 2, 0], sizes = [16, 16, 4], strides = [1, 1, 1]} : vector<18x18x4xf32> to vector<16x16x4xf32>
    %46 = vector.broadcast %17 : vector<1x1x4xf32> to vector<16x16x4xf32>
    %47 = arith.mulf %45, %46 : vector<16x16x4xf32>
    %48 = arith.addf %44, %47 : vector<16x16x4xf32>
    %49 = vector.extract_strided_slice %37 {offsets = [1, 0, 0], sizes = [16, 16, 4], strides = [1, 1, 1]} : vector<18x18x4xf32> to vector<16x16x4xf32>
    %50 = vector.broadcast %19 : vector<1x1x4xf32> to vector<16x16x4xf32>
    %51 = arith.mulf %49, %50 : vector<16x16x4xf32>
    %52 = arith.addf %48, %51 : vector<16x16x4xf32>
    %53 = vector.extract_strided_slice %37 {offsets = [1, 1, 0], sizes = [16, 16, 4], strides = [1, 1, 1]} : vector<18x18x4xf32> to vector<16x16x4xf32>
    %54 = vector.broadcast %21 : vector<1x1x4xf32> to vector<16x16x4xf32>
    %55 = arith.mulf %53, %54 : vector<16x16x4xf32>
    %56 = arith.addf %52, %55 : vector<16x16x4xf32>
    %57 = vector.extract_strided_slice %37 {offsets = [1, 2, 0], sizes = [16, 16, 4], strides = [1, 1, 1]} : vector<18x18x4xf32> to vector<16x16x4xf32>
    %58 = vector.broadcast %23 : vector<1x1x4xf32> to vector<16x16x4xf32>
    %59 = arith.mulf %57, %58 : vector<16x16x4xf32>
    %60 = arith.addf %56, %59 : vector<16x16x4xf32>
    %61 = vector.extract_strided_slice %37 {offsets = [2, 0, 0], sizes = [16, 16, 4], strides = [1, 1, 1]} : vector<18x18x4xf32> to vector<16x16x4xf32>
    %62 = vector.broadcast %25 : vector<1x1x4xf32> to vector<16x16x4xf32>
    %63 = arith.mulf %61, %62 : vector<16x16x4xf32>
    %64 = arith.addf %60, %63 : vector<16x16x4xf32>
    %65 = vector.extract_strided_slice %37 {offsets = [2, 1, 0], sizes = [16, 16, 4], strides = [1, 1, 1]} : vector<18x18x4xf32> to vector<16x16x4xf32>
    %66 = vector.broadcast %27 : vector<1x1x4xf32> to vector<16x16x4xf32>
    %67 = arith.mulf %65, %66 : vector<16x16x4xf32>
    %68 = arith.addf %64, %67 : vector<16x16x4xf32>
    %69 = vector.extract_strided_slice %37 {offsets = [2, 2, 0], sizes = [16, 16, 4], strides = [1, 1, 1]} : vector<18x18x4xf32> to vector<16x16x4xf32>
    %70 = vector.broadcast %29 : vector<1x1x4xf32> to vector<16x16x4xf32>
    %71 = arith.mulf %69, %70 : vector<16x16x4xf32>
    %72 = arith.addf %68, %71 : vector<16x16x4xf32>
    %c0_28 = arith.constant 0 : index
    %c0_29 = arith.constant 0 : index
    %c0_30 = arith.constant 0 : index
    %73 = vector.load %arg5[%c0_28, %c0_29, %c0_30] : memref<1x1x4xf32, #tpu.memory_space<vmem>>, vector<1x1x4xf32>
    %74 = vector.broadcast %73 : vector<1x1x4xf32> to vector<16x16x4xf32>
    %75 = arith.addf %72, %74 : vector<16x16x4xf32>
    %cst_31 = arith.constant 0.000000e+00 : f32
    %76 = vector.broadcast %cst_31 : f32 to vector<16x16x4xf32>
    %77 = arith.maximumf %75, %76 : vector<16x16x4xf32>
    %78 = vector.shape_cast %77 : vector<16x16x4xf32> to vector<256x4xf32>
    %c0_32 = arith.constant 0 : index
    %c0_33 = arith.constant 0 : index
    %79 = vector.load %arg6[%c0_32, %c0_33] : memref<4x16xf32, #tpu.memory_space<vmem>>, vector<4x16xf32>
    %cst_34 = arith.constant dense<0.000000e+00> : vector<256x16xf32>
    %80 = tpu.matmul %78, %79, %cst_34 {dimension_numbers = #tpu.dot_dimension_numbers<[1], [0], [0], [1], [0, 0, 1, 1], [], []>} : vector<256x4xf32>, vector<4x16xf32>, vector<256x16xf32> -> vector<256x16xf32>
    %c0_35 = arith.constant 0 : index
    %c0_36 = arith.constant 0 : index
    %81 = vector.load %arg7[%c0_35, %c0_36] : memref<1x16xf32, #tpu.memory_space<vmem>>, vector<1x16xf32>
    %82 = vector.broadcast %81 : vector<1x16xf32> to vector<256x16xf32>
    %83 = arith.addf %80, %82 : vector<256x16xf32>
    %84 = arith.addf %83, %2 : vector<256x16xf32>
    %cst_37 = arith.constant 0.000000e+00 : f32
    %85 = vector.broadcast %cst_37 : f32 to vector<256x16xf32>
    %86 = arith.maximumf %84, %85 : vector<256x16xf32>
    %c0_38 = arith.constant 0 : index
    %c0_39 = arith.constant 0 : index
    %c0_40 = arith.constant 0 : index
    %87 = vector.load %arg8[%c0_38, %c0_39, %c0_40] : memref<1x256x16xf32, #tpu.memory_space<vmem>>, vector<1x256x16xf32>
    %88 = vector.shape_cast %87 : vector<1x256x16xf32> to vector<256x16xf32>
    %89 = vector.shape_cast %86 : vector<256x16xf32> to vector<1x256x16xf32>
    tpu.vector_store %arg8[%c0_38, %c0_39, %c0_40], %89 {strides = array<i32>} : memref<1x256x16xf32, #tpu.memory_space<vmem>>, vector<1x256x16xf32>,
    return
  }
  func.func @transform_0(%arg0: i32) -> (i32, i32, i32, i32) {
    %c0_i32 = arith.constant 0 : i32
    %c0_i32_0 = arith.constant 0 : i32
    %c0_i32_1 = arith.constant 0 : i32
    %c0_i32_2 = arith.constant 0 : i32
    return %arg0, %c0_i32, %c0_i32_0, %c0_i32_1 : i32, i32, i32, i32
  }
  func.func @transform_1(%arg0: i32) -> (i32, i32) {
    %c0_i32 = arith.constant 0 : i32
    %c0_i32_0 = arith.constant 0 : i32
    %c0_i32_1 = arith.constant 0 : i32
    return %c0_i32, %c0_i32_0 : i32, i32
  }
  func.func @transform_2(%arg0: i32) -> (i32, i32) {
    %c0_i32 = arith.constant 0 : i32
    %c0_i32_0 = arith.constant 0 : i32
    %c0_i32_1 = arith.constant 0 : i32
    return %c0_i32, %c0_i32_0 : i32, i32
  }
  func.func @transform_3(%arg0: i32) -> (i32, i32) {
    %c0_i32 = arith.constant 0 : i32
    %c0_i32_0 = arith.constant 0 : i32
    %c0_i32_1 = arith.constant 0 : i32
    return %c0_i32, %c0_i32_0 : i32, i32
  }
  func.func @transform_4(%arg0: i32) -> (i32, i32, i32) {
    %c0_i32 = arith.constant 0 : i32
    %c0_i32_0 = arith.constant 0 : i32
    %c0_i32_1 = arith.constant 0 : i32
    %c0_i32_2 = arith.constant 0 : i32
    return %c0_i32, %c0_i32_0, %c0_i32_1 : i32, i32, i32
  }
  func.func @transform_5(%arg0: i32) -> (i32, i32) {
    %c0_i32 = arith.constant 0 : i32
    %c0_i32_0 = arith.constant 0 : i32
    %c0_i32_1 = arith.constant 0 : i32
    return %c0_i32, %c0_i32_0 : i32, i32
  }
  func.func @transform_6(%arg0: i32) -> (i32, i32) {
    %c0_i32 = arith.constant 0 : i32
    %c0_i32_0 = arith.constant 0 : i32
    %c0_i32_1 = arith.constant 0 : i32
    return %c0_i32, %c0_i32_0 : i32, i32
  }
  func.func @transform_7(%arg0: i32) -> (i32, i32, i32) {
    %c0_i32 = arith.constant 0 : i32
    %c0_i32_0 = arith.constant 0 : i32
    %c0_i32_1 = arith.constant 0 : i32
    return %arg0, %c0_i32, %c0_i32_0 : i32, i32, i32
  }
}

</mosaic_0001>

<llo_original>
// kernel: tpu_custom_call.1
$region0: #{tpu_custom_call.1}
  #allocation0 [shape = 'u32[]', space=smem, size = 0x4, offset = 0x4, fixed_abs, tag = 'smem constant byte address 0x4 - core index']
  #allocation1 [shape = 'u32[144,128]{1,0:T(1,128)}', space=vmem, size = 0x12000, scoped, tag = 'internal scratch']
  #allocation2 [shape = 'f32[18,18,4]{2,1,0:T(8,128)}', space=vmem, size = 0x36000, scoped, tag = 'scratch operand']
  %s0 = inlined_call_operand.hbm [shape: f32[2,16,16,16], index: 0, kind: input, shape index: {}]
  %s1 = inlined_call_operand.vmem [shape: f32[16,4], index: 1, kind: input, shape index: {}]
  %s2 = inlined_call_operand.vmem [shape: f32[1,4], index: 2, kind: input, shape index: {}]
  %s3 = inlined_call_operand.vmem [shape: f32[9,4], index: 3, kind: input, shape index: {}]
  %s4 = inlined_call_operand.vmem [shape: f32[1,1,4], index: 4, kind: input, shape index: {}]
  %s5 = inlined_call_operand.vmem [shape: f32[4,16], index: 5, kind: input, shape index: {}]
  %s6 = inlined_call_operand.vmem [shape: f32[1,16], index: 6, kind: input, shape index: {}]
  %s7 = inlined_call_operand.vmem [shape: f32[2,256,16], index: 7, kind: output, shape index: {}]
  %s8 = sld [smem:[#allocation0]]
  $region65: #{tpu_custom_call.1} parent=0
    _
  %s10 = ssub.s32 1, %s8
  %s11 = scalar_select 0, %s10, %s8
  $region1: #{tpu_custom_call.1} parent=0
    #allocation3 [shape = 'u8[262144]{0}', space=vmem, size = 0x40000, scoped, tag = 'input window, operand 0']
    #allocation4 [shape = 's32[2]{0}', space=sflag, size = 0x8, scoped, tag = 'scoped memory for tpu_custom_call.1']
    %12 = vsyncpa [#allocation4], 0
    %s13 = scalar_lea.sflag [#allocation4], 1
    %14 = vsyncpa %s13, 0
    loop: start=0, step=1, limit=4
    $region2: #{tpu_custom_call.1} parent=1 // loop_pre_header
      _
    $region3: #{tpu_custom_call.1} parent=1 // loop_header
      %s16 = sphi 0, %s20
      %p17 = scmp.ge.s32.totalorder %s16, 4
      %s26 = sphi 0, %s28
      %s29 = sphi 0, %s26
      %s30 = sphi 0, %s29
      %s46 = sphi 0, %s30
      %s50 = sphi 0, %s50
      %s52 = sphi 0, %s50
      %s53 = sphi 0, %s52
      %s67 = sphi 0, %s53
      %s71 = sphi 0, %s71
      %s73 = sphi 0, %s71
      %s74 = sphi 0, %s73
      %s88 = sphi 0, %s74
      %s92 = sphi 0, %s92
      %s94 = sphi 0, %s92
      %s95 = sphi 0, %s94
      %s109 = sphi 0, %s95
      %s113 = sphi 0, %s113
      %s115 = sphi 0, %s113
      %s116 = sphi 0, %s115
      %s130 = sphi 0, %s116
      %s134 = sphi 0, %s134
      %s136 = sphi 0, %s134
      %s137 = sphi 0, %s136
      %s151 = sphi 0, %s137
      %s155 = sphi 0, %s155
      %s157 = sphi 0, %s155
      %s158 = sphi 0, %s157
      %s172 = sphi 0, %s158
      %s178 = sphi 0, %s180
      %s181 = sphi 0, %s178
      %s182 = sphi 0, %s181
      %s198 = sphi 0, %s182
    $region4: #{tpu_custom_call.1} parent=1 // loop_header_branch
      %19 = sbr.rel (%p17) target = $region8
    $region5: #{tpu_custom_call.1} parent=1 // loop_body
      %s21 = ssub.s32 %s16, 1
      %s22 = ssub.s32 %s16, 2
      %s23 = sadd.s32 %s16, 1
      %s24 = ssub.s32 %s16, %s23
      %p25 = scmp.eq.s32.totalorder %s24, 0
      %s27 = sadd.s32 %s26, 1
      %s28 = scalar_select %p25, %s26, %s27
      %p31 = pneg %p25
      %p32 = scmp.eq.s32.totalorder %s16, 1
      %p33 = por %p31, %p32
      %p34 = scmp.ne.s32.totalorder %s26, %s29
      %p35 = scmp.eq.s32.totalorder %s16, 0
      %p36 = por %p34, %p35
      %p37 = scmp.ne.s32.totalorder %s26, %s29
      %p38 = scmp.eq.s32.totalorder %s21, 1
      %p39 = por %p37, %p38
      %p40 = scmp.ne.s32.totalorder %s29, %s30
      %p41 = scmp.eq.s32.totalorder %s21, 0
      %p42 = por %p40, %p41
      %p43 = scmp.ne.s32.totalorder %s29, %s30
      %p44 = scmp.eq.s32.totalorder %s22, 1
      %p45 = por %p43, %p44
      %p47 = scmp.ne.s32.totalorder %s30, %s46
      %p48 = scmp.eq.s32.totalorder %s22, 0
      %p49 = por %p47, %p48
      %s51 = sadd.s32 %s50, 1
      %p54 = scmp.eq.s32.totalorder %s16, 1
      %p55 = scmp.ne.s32.totalorder %s50, %s52
      %p56 = scmp.eq.s32.totalorder %s16, 0
      %p57 = por %p55, %p56
      %p58 = scmp.ne.s32.totalorder %s50, %s52
      %p59 = scmp.eq.s32.totalorder %s21, 1
      %p60 = por %p58, %p59
      %p61 = scmp.ne.s32.totalorder %s52, %s53
      %p62 = scmp.eq.s32.totalorder %s21, 0
      %p63 = por %p61, %p62
      %p64 = scmp.ne.s32.totalorder %s52, %s53
      %p65 = scmp.eq.s32.totalorder %s22, 1
      %p66 = por %p64, %p65
      %p68 = scmp.ne.s32.totalorder %s53, %s67
      %p69 = scmp.eq.s32.totalorder %s22, 0
      %p70 = por %p68, %p69
      %s72 = sadd.s32 %s71, 1
      %p75 = scmp.eq.s32.totalorder %s16, 1
      %p76 = scmp.ne.s32.totalorder %s71, %s73
      %p77 = scmp.eq.s32.totalorder %s16, 0
      %p78 = por %p76, %p77
      %p79 = scmp.ne.s32.totalorder %s71, %s73
      %p80 = scmp.eq.s32.totalorder %s21, 1
      %p81 = por %p79, %p80
      %p82 = scmp.ne.s32.totalorder %s73, %s74
      %p83 = scmp.eq.s32.totalorder %s21, 0
      %p84 = por %p82, %p83
      %p85 = scmp.ne.s32.totalorder %s73, %s74
      %p86 = scmp.eq.s32.totalorder %s22, 1
      %p87 = por %p85, %p86
      %p89 = scmp.ne.s32.totalorder %s74, %s88
      %p90 = scmp.eq.s32.totalorder %s22, 0
      %p91 = por %p89, %p90
      %s93 = sadd.s32 %s92, 1
      %p96 = scmp.eq.s32.totalorder %s16, 1
      %p97 = scmp.ne.s32.totalorder %s92, %s94
      %p98 = scmp.eq.s32.totalorder %s16, 0
      %p99 = por %p97, %p98
      %p100 = scmp.ne.s32.totalorder %s92, %s94
      %p101 = scmp.eq.s32.totalorder %s21, 1
      %p102 = por %p100, %p101
      %p103 = scmp.ne.s32.totalorder %s94, %s95
      %p104 = scmp.eq.s32.totalorder %s21, 0
      %p105 = por %p103, %p104
      %p106 = scmp.ne.s32.totalorder %s94, %s95
      %p107 = scmp.eq.s32.totalorder %s22, 1
      %p108 = por %p106, %p107
      %p110 = scmp.ne.s32.totalorder %s95, %s109
      %p111 = scmp.eq.s32.totalorder %s22, 0
      %p112 = por %p110, %p111
      %s114 = sadd.s32 %s113, 1
      %p117 = scmp.eq.s32.totalorder %s16, 1
      %p118 = scmp.ne.s32.totalorder %s113, %s115
      %p119 = scmp.eq.s32.totalorder %s16, 0
      %p120 = por %p118, %p119
      %p121 = scmp.ne.s32.totalorder %s113, %s115
      %p122 = scmp.eq.s32.totalorder %s21, 1
      %p123 = por %p121, %p122
      %p124 = scmp.ne.s32.totalorder %s115, %s116
      %p125 = scmp.eq.s32.totalorder %s21, 0
      %p126 = por %p124, %p125
      %p127 = scmp.ne.s32.totalorder %s115, %s116
      %p128 = scmp.eq.s32.totalorder %s22, 1
      %p129 = por %p127, %p128
      %p131 = scmp.ne.s32.totalorder %s116, %s130
      %p132 = scmp.eq.s32.totalorder %s22, 0
      %p133 = por %p131, %p132
      %s135 = sadd.s32 %s134, 1
      %p138 = scmp.eq.s32.totalorder %s16, 1
      %p139 = scmp.ne.s32.totalorder %s134, %s136
      %p140 = scmp.eq.s32.totalorder %s16, 0
      %p141 = por %p139, %p140
      %p142 = scmp.ne.s32.totalorder %s134, %s136
      %p143 = scmp.eq.s32.totalorder %s21, 1
      %p144 = por %p142, %p143
      %p145 = scmp.ne.s32.totalorder %s136, %s137
      %p146 = scmp.eq.s32.totalorder %s21, 0
      %p147 = por %p145, %p146
      %p148 = scmp.ne.s32.totalorder %s136, %s137
      %p149 = scmp.eq.s32.totalorder %s22, 1
      %p150 = por %p148, %p149
      %p152 = scmp.ne.s32.totalorder %s137, %s151
      %p153 = scmp.eq.s32.totalorder %s22, 0
      %p154 = por %p152, %p153
      %s156 = sadd.s32 %s155, 1
      %p159 = scmp.eq.s32.totalorder %s16, 1
      %p160 = scmp.ne.s32.totalorder %s155, %s157
      %p161 = scmp.eq.s32.totalorder %s16, 0
      %p162 = por %p160, %p161
      %p163 = scmp.ne.s32.totalorder %s155, %s157
      %p164 = scmp.eq.s32.totalorder %s21, 1
      %p165 = por %p163, %p164
      %p166 = scmp.ne.s32.totalorder %s157, %s158
      %p167 = scmp.eq.s32.totalorder %s21, 0
      %p168 = por %p166, %p167
      %p169 = scmp.ne.s32.totalorder %s157, %s158
      %p170 = scmp.eq.s32.totalorder %s22, 1
      %p171 = por %p169, %p170
      %p173 = scmp.ne.s32.totalorder %s158, %s172
      %p174 = scmp.eq.s32.totalorder %s22, 0
      %p175 = por %p173, %p174
      %s176 = ssub.s32 %s16, %s23
      %p177 = scmp.eq.s32.totalorder %s176, 0
      %s179 = sadd.s32 %s178, 1
      %s180 = scalar_select %p177, %s178, %s179
      %p183 = pneg %p177
      %p184 = scmp.eq.s32.totalorder %s16, 1
      %p185 = por %p183, %p184
      %p186 = scmp.ne.s32.totalorder %s178, %s181
      %p187 = scmp.eq.s32.totalorder %s16, 0
      %p188 = por %p186, %p187
      %p189 = scmp.ne.s32.totalorder %s178, %s181
      %p190 = scmp.eq.s32.totalorder %s21, 1
      %p191 = por %p189, %p190
      %p192 = scmp.ne.s32.totalorder %s181, %s182
      %p193 = scmp.eq.s32.totalorder %s21, 0
      %p194 = por %p192, %p193
      %p195 = scmp.ne.s32.totalorder %s181, %s182
      %p196 = scmp.eq.s32.totalorder %s22, 1
      %p197 = por %p195, %p196
      %p199 = scmp.ne.s32.totalorder %s182, %s198
      %p200 = scmp.eq.s32.totalorder %s22, 0
      %p201 = por %p199, %p200
      %p202 = scmp.le.s32.totalorder 1, %s16
      %p203 = scmp.lt.s32.totalorder %s16, 3
      %p204 = pnand %p202, %p203
      %p205 = pneg %p204
      // Predicated region
      $region9: #{tpu_custom_call.1} parent=5 // pred_check
        _
      $region10: #{tpu_custom_call.1} parent=5 // pred_check_branch
        %207 = sbr.rel (%p204) target = $region12
      $region11: #{tpu_custom_call.1} parent=5 // pred_region
        %s208 = ssub.s32 %s16, 1
        // Predicated region
        $region13: #{tpu_custom_call.1} parent=11 // pred_check
          %p209 = pneg %p63
        $region14: #{tpu_custom_call.1} parent=11 // pred_check_branch
          %211 = sbr.rel (%p209) target = $region16
        $region15: #{tpu_custom_call.1} parent=11 // pred_region
          _
        $region16: #{tpu_custom_call.1} parent=11 // pred_fallthru
          _
        // Predicated region
        $region17: #{tpu_custom_call.1} parent=11 // pred_check
          %p212 = pneg %p84
        $region18: #{tpu_custom_call.1} parent=11 // pred_check_branch
          %214 = sbr.rel (%p212) target = $region20
        $region19: #{tpu_custom_call.1} parent=11 // pred_region
          _
        $region20: #{tpu_custom_call.1} parent=11 // pred_fallthru
          _
        // Predicated region
        $region21: #{tpu_custom_call.1} parent=11 // pred_check
          %p215 = pneg %p105
        $region22: #{tpu_custom_call.1} parent=11 // pred_check_branch
          %217 = sbr.rel (%p215) target = $region24
        $region23: #{tpu_custom_call.1} parent=11 // pred_region
          _
        $region24: #{tpu_custom_call.1} parent=11 // pred_fallthru
          _
        // Predicated region
        $region25: #{tpu_custom_call.1} parent=11 // pred_check
          %p218 = pneg %p126
        $region26: #{tpu_custom_call.1} parent=11 // pred_check_branch
          %220 = sbr.rel (%p218) target = $region28
        $region27: #{tpu_custom_call.1} parent=11 // pred_region
          _
        $region28: #{tpu_custom_call.1} parent=11 // pred_fallthru
          _
        // Predicated region
        $region29: #{tpu_custom_call.1} parent=11 // pred_check
          %p221 = pneg %p147
        $region30: #{tpu_custom_call.1} parent=11 // pred_check_branch
          %223 = sbr.rel (%p221) target = $region32
        $region31: #{tpu_custom_call.1} parent=11 // pred_region
          _
        $region32: #{tpu_custom_call.1} parent=11 // pred_fallthru
          _
        // Predicated region
        $region33: #{tpu_custom_call.1} parent=11 // pred_check
          %p224 = pneg %p168
        $region34: #{tpu_custom_call.1} parent=11 // pred_check_branch
          %226 = sbr.rel (%p224) target = $region36
        $region35: #{tpu_custom_call.1} parent=11 // pred_region
          _
        $region36: #{tpu_custom_call.1} parent=11 // pred_fallthru
          _
      $region12: #{tpu_custom_call.1} parent=5 // pred_fallthru
        _
      %p227 = scmp.lt.s32.totalorder %s16, 2
      // Predicated region
      $region37: #{tpu_custom_call.1} parent=5 // pred_check
        %p228 = pneg %p227
      $region38: #{tpu_custom_call.1} parent=5 // pred_check_branch
        %230 = sbr.rel (%p228) target = $region40
      $region39: #{tpu_custom_call.1} parent=5 // pred_region
        // Predicated region
        $region41: #{tpu_custom_call.1} parent=39 // pred_check
          %p231 = pneg %p36
        $region42: #{tpu_custom_call.1} parent=39 // pred_check_branch
          %233 = sbr.rel (%p231) target = $region44
        $region43: #{tpu_custom_call.1} parent=39 // pred_region
          %s234 = sand.u32 %s26, 1
          %s235 = scalar_lea.sflag [#allocation4], %s234
          %s236 = sand.u32 %s26, 1
          %s237 = smul.addr %s236, 256
          %s238 = scalar_lea.vmem [#allocation3], %s237
          %s240 = ssub.s32 4096, 4096
          %241 = vsyncadd %s235, %s240
          %s242 = smul.addr %s16, 32
          %s243 = smul.addr %s242, 128
          %s244 = scalar_lea.hbm %s0, %s243
          %s245 = sshll.u32 %s238, 4
          %s246 = int_to_ptr.vmem [resolvable:$true] %s245
          %251 = dma.hbm_to_vmem [thread:$0]  %s244, 4096, %s246, %s235, 128, 128, 8
        $region44: #{tpu_custom_call.1} parent=39 // pred_fallthru
          _
      $region40: #{tpu_custom_call.1} parent=5 // pred_fallthru
        _
      %p252 = scmp.le.s32.totalorder 1, %s16
      %p253 = scmp.lt.s32.totalorder %s16, 3
      %p254 = pnand %p252, %p253
      %p255 = pneg %p254
      // Predicated region
      $region45: #{tpu_custom_call.1} parent=5 // pred_check
        _
      $region46: #{tpu_custom_call.1} parent=5 // pred_check_branch
        %257 = sbr.rel (%p254) target = $region48
      $region47: #{tpu_custom_call.1} parent=5 // pred_region
        %s258 = ssub.s32 %s16, 1
        %s259 = sand.u32 %s29, 1
        %s260 = scalar_lea.sflag [#allocation4], %s259
        %s261 = sand.u32 %s29, 1
        %s262 = smul.addr %s261, 256
        %s263 = scalar_lea.vmem [#allocation3], %s262
        // Predicated region
        $region49: #{tpu_custom_call.1} parent=47 // pred_check
          %p264 = pneg %p42
        $region50: #{tpu_custom_call.1} parent=47 // pred_check_branch
          %266 = sbr.rel (%p264) target = $region52
        $region51: #{tpu_custom_call.1} parent=47 // pred_region
          %267 = dma.done %s260, 4096
        $region52: #{tpu_custom_call.1} parent=47 // pred_fallthru
          _
        %s268 = sand.u32 %s29, 1
        %s269 = scalar_lea.sflag [#allocation4], %s268
        %s270 = sand.u32 %s29, 1
        %s271 = smul.addr %s270, 256
        %s272 = scalar_lea.vmem [#allocation3], %s271
        %p273 = pneg %p42
        %p274 = pneg %p39
        %p275 = pneg %p63
        %p276 = pneg %p60
        %p277 = pneg %p84
        %p278 = pneg %p81
        %p279 = pneg %p105
        %p280 = pneg %p102
        %p281 = pneg %p126
        %p282 = pneg %p123
        %p283 = pneg %p147
        %p284 = pneg %p144
        %p285 = pneg %p168
        %p286 = pneg %p165
        %p287 = pneg %p194
        %p288 = pneg %p191
        %p289 = scmp.lt.s32.totalorder %s21, 1
        %s290 = scalar_select %p289, %s21, 1
        %s291 = smul.addr %s290, 32
        %s292 = smul.addr %s291, 8
        %s293 = scalar_lea.vmem %s7, %s292
        %p294 = scmp.lt.s32.totalorder %s21, 1
        %s295 = scalar_select %p294, %s21, 1
        %s296 = smul.addr %s295, 32
        %s297 = smul.addr %s296, 8
        %s298 = scalar_lea.vmem %s7, %s297
        %v299 = vld [vmem:[%s263] sm:$0xff]
        %v300 = vld [vmem:[%s263 + $0x8] sm:$0xff]
        %v301 = vld [vmem:[%s263 + $0x10] sm:$0xff]
        %v302 = vld [vmem:[%s263 + $0x18] sm:$0xff]
        %v303 = vld [vmem:[%s263 + $0x20] sm:$0xff]
        %v304 = vld [vmem:[%s263 + $0x28] sm:$0xff]
        %v305 = vld [vmem:[%s263 + $0x30] sm:$0xff]
        %v306 = vld [vmem:[%s263 + $0x38] sm:$0xff]
        %v307 = vld [vmem:[%s263 + $0x40] sm:$0xff]
        %v308 = vld [vmem:[%s263 + $0x48] sm:$0xff]
        %v309 = vld [vmem:[%s263 + $0x50] sm:$0xff]
        %v310 = vld [vmem:[%s263 + $0x58] sm:$0xff]
        %v311 = vld [vmem:[%s263 + $0x60] sm:$0xff]
        %v312 = vld [vmem:[%s263 + $0x68] sm:$0xff]
        %v313 = vld [vmem:[%s263 + $0x70] sm:$0xff]
        %v314 = vld [vmem:[%s263 + $0x78] sm:$0xff]
        %v315 = vld [vmem:[%s263 + $0x80] sm:$0xff]
        %v316 = vld [vmem:[%s263 + $0x88] sm:$0xff]
        %v317 = vld [vmem:[%s263 + $0x90] sm:$0xff]
        %v318 = vld [vmem:[%s263 + $0x98] sm:$0xff]
        %v319 = vld [vmem:[%s263 + $0xa0] sm:$0xff]
        %v320 = vld [vmem:[%s263 + $0xa8] sm:$0xff]
        %v321 = vld [vmem:[%s263 + $0xb0] sm:$0xff]
        %v322 = vld [vmem:[%s263 + $0xb8] sm:$0xff]
        %v323 = vld [vmem:[%s263 + $0xc0] sm:$0xff]
        %v324 = vld [vmem:[%s263 + $0xc8] sm:$0xff]
        %v325 = vld [vmem:[%s263 + $0xd0] sm:$0xff]
        %v326 = vld [vmem:[%s263 + $0xd8] sm:$0xff]
        %v327 = vld [vmem:[%s263 + $0xe0] sm:$0xff]
        %v328 = vld [vmem:[%s263 + $0xe8] sm:$0xff]
        %v329 = vld [vmem:[%s263 + $0xf0] sm:$0xff]
        %v330 = vld [vmem:[%s263 + $0xf8] sm:$0xff]
        %v331 = vld [vmem:[%s1] sm:$0xff]
        %v332 = vld [vmem:[%s1 + $0x8] sm:$0xff]
        %v333 = vld [vmem:[%s2] sm:$0x1]
        %v335 = vlaneseq
        %v336 = vshrl.u32 %v335, 7
        %v337 = vsub.s32 0, %v336
        %v338 = vrot.slane %v333, %v337
        %vm340 = vcmask 130048
        %v342 = vsel %vm340, %v299, 0
        %v345 = vsel %vm340, %v300, 0
        %v348 = vsel %vm340, %v301, 0
        %v351 = vsel %vm340, %v302, 0
        %v354 = vsel %vm340, %v303, 0
        %v357 = vsel %vm340, %v304, 0
        %v360 = vsel %vm340, %v305, 0
        %v363 = vsel %vm340, %v306, 0
        %v366 = vsel %vm340, %v307, 0
        %v369 = vsel %vm340, %v308, 0
        %v372 = vsel %vm340, %v309, 0
        %v375 = vsel %vm340, %v310, 0
        %v378 = vsel %vm340, %v311, 0
        %v381 = vsel %vm340, %v312, 0
        %v384 = vsel %vm340, %v313, 0
        %v387 = vsel %vm340, %v314, 0
        %v390 = vsel %vm340, %v315, 0
        %v393 = vsel %vm340, %v316, 0
        %v396 = vsel %vm340, %v317, 0
        %v399 = vsel %vm340, %v318, 0
        %v402 = vsel %vm340, %v319, 0
        %v405 = vsel %vm340, %v320, 0
        %v408 = vsel %vm340, %v321, 0
        %v411 = vsel %vm340, %v322, 0
        %v414 = vsel %vm340, %v323, 0
        %v417 = vsel %vm340, %v324, 0
        %v420 = vsel %vm340, %v325, 0
        %v423 = vsel %vm340, %v326, 0
        %v426 = vsel %vm340, %v327, 0
        %v429 = vsel %vm340, %v328, 0
        %v432 = vsel %vm340, %v329, 0
        %v435 = vsel %vm340, %v330, 0
        %437 = vmatprep.subr.mxu0 0.0
        %438 = vmatpush1.msra.mxu0 %v331
        %439 = vmatprep.subr.mxu0 0.0
        %440 = vmatpush1.msra.mxu0 %v332
        %441 = vmatprep.subr.mxu0 0.0
        %442 = vmatpush1.msra.mxu0 0.0
        %443 = vmatprep.subr.mxu0 0.0
        %444 = vmatpush1.msra.mxu0 0.0
        %445 = vmatprep.subr.mxu0 0.0
        %446 = vmatpush1.msra.mxu0 0.0
        %447 = vmatprep.subr.mxu0 0.0
        %448 = vmatpush1.msra.mxu0 0.0
        %449 = vmatprep.subr.mxu0 0.0
        %450 = vmatpush1.msra.mxu0 0.0
        %451 = vmatprep.subr.mxu0 0.0
        %452 = vmatpush1.msra.mxu0 0.0
        %453 = vmatprep.subr.mxu0 0.0
        %454 = vmatpush1.msra.mxu0 0.0
        %455 = vmatprep.subr.mxu0 0.0
        %456 = vmatpush1.msra.mxu0 0.0
        %457 = vmatprep.subr.mxu0 0.0
        %458 = vmatpush1.msra.mxu0 0.0
        %459 = vmatprep.subr.mxu0 0.0
        %460 = vmatpush1.msra.mxu0 0.0
        %461 = vmatprep.subr.mxu0 0.0
        %462 = vmatpush1.msra.mxu0 0.0
        %463 = vmatprep.subr.mxu0 0.0
        %464 = vmatpush1.msra.mxu0 0.0
        %465 = vmatprep.subr.mxu0 0.0
        %466 = vmatpush1.msra.mxu0 0.0
        %467 = vmatprep.subr.mxu0 0.0
        %468 = vmatpush1.msra.mxu0 0.0
        %469 = vmatprep.subr.mxu0 0.0
        %470 = vmatpush1.msra.mxu0 0.0
        %471 = vmatprep.subr.mxu0 0.0
        %472 = vmatpush1.msra.mxu0 0.0
        %473 = vmatprep.subr.mxu0 0.0
        %474 = vmatpush1.msra.mxu0 0.0
        %475 = vmatprep.subr.mxu0 0.0
        %476 = vmatpush1.msra.mxu0 0.0
        %477 = vmatprep.subr.mxu0 0.0
        %478 = vmatpush1.msra.mxu0 0.0
        %479 = vmatprep.subr.mxu0 0.0
        %480 = vmatpush1.msra.mxu0 0.0
        %481 = vmatprep.subr.mxu0 0.0
        %482 = vmatpush1.msra.mxu0 0.0
        %483 = vmatprep.subr.mxu0 0.0
        %484 = vmatpush1.msra.mxu0 0.0
        %485 = vmatprep.subr.mxu0 0.0
        %486 = vmatpush1.msra.mxu0 0.0
        %487 = vmatprep.subr.mxu0 0.0
        %488 = vmatpush1.msra.mxu0 0.0
        %489 = vmatprep.subr.mxu0 0.0
        %490 = vmatpush1.msra.mxu0 0.0
        %491 = vmatprep.subr.mxu0 0.0
        %492 = vmatpush1.msra.mxu0 0.0
        %493 = vmatprep.subr.mxu0 0.0
        %494 = vmatpush1.msra.mxu0 0.0
        %495 = vmatprep.subr.mxu0 0.0
        %496 = vmatpush1.msra.mxu0 0.0
        %497 = vmatprep.subr.mxu0 0.0
        %498 = vmatpush1.msra.mxu0 0.0
        %499 = vmatprep.subr.mxu0 0.0
        %500 = vmatpush1.msra.mxu0 0.0
        %501 = vmatprep.mubr.f32.mxu0 0.0
        %502 = vmatmul.mubr.f32.gmra.mrb[0].mxu0 %v342
        %v503 = vpop.f32.mrb[0].mxu0
        %v504 = vadd.f32 %v338, %v503
        %v505 = vpop.f32.mrb[0].mxu0
        %506 = vmatprep.mubr.f32.mxu0 0.0
        %507 = vmatmul.mubr.f32.gmra.mrb[0].mxu0 %v345
        %v508 = vpop.f32.mrb[0].mxu0
        %v509 = vadd.f32 %v338, %v508
        %v510 = vpop.f32.mrb[0].mxu0
        %511 = vmatprep.mubr.f32.mxu0 0.0
        %512 = vmatmul.mubr.f32.gmra.mrb[0].mxu0 %v348
        %v513 = vpop.f32.mrb[0].mxu0
        %v514 = vadd.f32 %v338, %v513
        %v515 = vpop.f32.mrb[0].mxu0
        %516 = vmatprep.mubr.f32.mxu0 0.0
        %517 = vmatmul.mubr.f32.gmra.mrb[0].mxu0 %v351
        %v518 = vpop.f32.mrb[0].mxu0
        %v519 = vadd.f32 %v338, %v518
        %v520 = vpop.f32.mrb[0].mxu0
        %521 = vmatprep.mubr.f32.mxu0 0.0
        %522 = vmatmul.mubr.f32.gmra.mrb[0].mxu0 %v354
        %v523 = vpop.f32.mrb[0].mxu0
        %v524 = vadd.f32 %v338, %v523
        %v525 = vpop.f32.mrb[0].mxu0
        %526 = vmatprep.mubr.f32.mxu0 0.0
        %527 = vmatmul.mubr.f32.gmra.mrb[0].mxu0 %v357
        %v528 = vpop.f32.mrb[0].mxu0
        %v529 = vadd.f32 %v338, %v528
        %v530 = vpop.f32.mrb[0].mxu0
        %531 = vmatprep.mubr.f32.mxu0 0.0
        %532 = vmatmul.mubr.f32.gmra.mrb[0].mxu0 %v360
        %v533 = vpop.f32.mrb[0].mxu0
        %v534 = vadd.f32 %v338, %v533
        %v535 = vpop.f32.mrb[0].mxu0
        %536 = vmatprep.mubr.f32.mxu0 0.0
        %537 = vmatmul.mubr.f32.gmra.mrb[0].mxu0 %v363
        %v538 = vpop.f32.mrb[0].mxu0
        %v539 = vadd.f32 %v338, %v538
        %v540 = vpop.f32.mrb[0].mxu0
        %541 = vmatprep.mubr.f32.mxu0 0.0
        %542 = vmatmul.mubr.f32.gmra.mrb[0].mxu0 %v366
        %v543 = vpop.f32.mrb[0].mxu0
        %v544 = vadd.f32 %v338, %v543
        %v545 = vpop.f32.mrb[0].mxu0
        %546 = vmatprep.mubr.f32.mxu0 0.0
        %547 = vmatmul.mubr.f32.gmra.mrb[0].mxu0 %v369
        %v548 = vpop.f32.mrb[0].mxu0
        %v549 = vadd.f32 %v338, %v548
        %v550 = vpop.f32.mrb[0].mxu0
        %551 = vmatprep.mubr.f32.mxu0 0.0
        %552 = vmatmul.mubr.f32.gmra.mrb[0].mxu0 %v372
        %v553 = vpop.f32.mrb[0].mxu0
        %v554 = vadd.f32 %v338, %v553
        %v555 = vpop.f32.mrb[0].mxu0
        %556 = vmatprep.mubr.f32.mxu0 0.0
        %557 = vmatmul.mubr.f32.gmra.mrb[0].mxu0 %v375
        %v558 = vpop.f32.mrb[0].mxu0
        %v559 = vadd.f32 %v338, %v558
        %v560 = vpop.f32.mrb[0].mxu0
        %561 = vmatprep.mubr.f32.mxu0 0.0
        %562 = vmatmul.mubr.f32.gmra.mrb[0].mxu0 %v378
        %v563 = vpop.f32.mrb[0].mxu0
        %v564 = vadd.f32 %v338, %v563
        %v565 = vpop.f32.mrb[0].mxu0
        %566 = vmatprep.mubr.f32.mxu0 0.0
        %567 = vmatmul.mubr.f32.gmra.mrb[0].mxu0 %v381
        %v568 = vpop.f32.mrb[0].mxu0
        %v569 = vadd.f32 %v338, %v568
        %v570 = vpop.f32.mrb[0].mxu0
        %571 = vmatprep.mubr.f32.mxu0 0.0
        %572 = vmatmul.mubr.f32.gmra.mrb[0].mxu0 %v384
        %v573 = vpop.f32.mrb[0].mxu0
        %v574 = vadd.f32 %v338, %v573
        %v575 = vpop.f32.mrb[0].mxu0
        %576 = vmatprep.mubr.f32.mxu0 0.0
        %577 = vmatmul.mubr.f32.gmra.mrb[0].mxu0 %v387
        %v578 = vpop.f32.mrb[0].mxu0
        %v579 = vadd.f32 %v338, %v578
        %v580 = vpop.f32.mrb[0].mxu0
        %581 = vmatprep.mubr.f32.mxu0 0.0
        %582 = vmatmul.mubr.f32.gmra.mrb[0].mxu0 %v390
        %v583 = vpop.f32.mrb[0].mxu0
        %v584 = vadd.f32 %v338, %v583
        %v585 = vpop.f32.mrb[0].mxu0
        %586 = vmatprep.mubr.f32.mxu0 0.0
        %587 = vmatmul.mubr.f32.gmra.mrb[0].mxu0 %v393
        %v588 = vpop.f32.mrb[0].mxu0
        %v589 = vadd.f32 %v338, %v588
        %v590 = vpop.f32.mrb[0].mxu0
        %591 = vmatprep.mubr.f32.mxu0 0.0
        %592 = vmatmul.mubr.f32.gmra.mrb[0].mxu0 %v396
        %v593 = vpop.f32.mrb[0].mxu0
        %v594 = vadd.f32 %v338, %v593
        %v595 = vpop.f32.mrb[0].mxu0
        %596 = vmatprep.mubr.f32.mxu0 0.0
        %597 = vmatmul.mubr.f32.gmra.mrb[0].mxu0 %v399
        %v598 = vpop.f32.mrb[0].mxu0
        %v599 = vadd.f32 %v338, %v598
        %v600 = vpop.f32.mrb[0].mxu0
        %601 = vmatprep.mubr.f32.mxu0 0.0
        %602 = vmatmul.mubr.f32.gmra.mrb[0].mxu0 %v402
        %v603 = vpop.f32.mrb[0].mxu0
        %v604 = vadd.f32 %v338, %v603
        %v605 = vpop.f32.mrb[0].mxu0
        %606 = vmatprep.mubr.f32.mxu0 0.0
        %607 = vmatmul.mubr.f32.gmra.mrb[0].mxu0 %v405
        %v608 = vpop.f32.mrb[0].mxu0
        %v609 = vadd.f32 %v338, %v608
        %v610 = vpop.f32.mrb[0].mxu0
        %611 = vmatprep.mubr.f32.mxu0 0.0
        %612 = vmatmul.mubr.f32.gmra.mrb[0].mxu0 %v408
        %v613 = vpop.f32.mrb[0].mxu0
        %v614 = vadd.f32 %v338, %v613
        %v615 = vpop.f32.mrb[0].mxu0
        %616 = vmatprep.mubr.f32.mxu0 0.0
        %617 = vmatmul.mubr.f32.gmra.mrb[0].mxu0 %v411
        %v618 = vpop.f32.mrb[0].mxu0
        %v619 = vadd.f32 %v338, %v618
        %v620 = vpop.f32.mrb[0].mxu0
        %621 = vmatprep.mubr.f32.mxu0 0.0
        %622 = vmatmul.mubr.f32.gmra.mrb[0].mxu0 %v414
        %v623 = vpop.f32.mrb[0].mxu0
        %v624 = vadd.f32 %v338, %v623
        %v625 = vpop.f32.mrb[0].mxu0
        %626 = vmatprep.mubr.f32.mxu0 0.0
        %627 = vmatmul.mubr.f32.gmra.mrb[0].mxu0 %v417
        %v628 = vpop.f32.mrb[0].mxu0
        %v629 = vadd.f32 %v338, %v628
        %v630 = vpop.f32.mrb[0].mxu0
        %631 = vmatprep.mubr.f32.mxu0 0.0
        %632 = vmatmul.mubr.f32.gmra.mrb[0].mxu0 %v420
        %v633 = vpop.f32.mrb[0].mxu0
        %v634 = vadd.f32 %v338, %v633
        %v635 = vpop.f32.mrb[0].mxu0
        %636 = vmatprep.mubr.f32.mxu0 0.0
        %637 = vmatmul.mubr.f32.gmra.mrb[0].mxu0 %v423
        %v638 = vpop.f32.mrb[0].mxu0
        %v639 = vadd.f32 %v338, %v638
        %v640 = vpop.f32.mrb[0].mxu0
        %641 = vmatprep.mubr.f32.mxu0 0.0
        %642 = vmatmul.mubr.f32.gmra.mrb[0].mxu0 %v426
        %v643 = vpop.f32.mrb[0].mxu0
        %v644 = vadd.f32 %v338, %v643
        %v645 = vpop.f32.mrb[0].mxu0
        %646 = vmatprep.mubr.f32.mxu0 0.0
        %647 = vmatmul.mubr.f32.gmra.mrb[0].mxu0 %v429
        %v648 = vpop.f32.mrb[0].mxu0
        %v649 = vadd.f32 %v338, %v648
        %v650 = vpop.f32.mrb[0].mxu0
        %651 = vmatprep.mubr.f32.mxu0 0.0
        %652 = vmatmul.mubr.f32.gmra.mrb[0].mxu0 %v432
        %v653 = vpop.f32.mrb[0].mxu0
        %v654 = vadd.f32 %v338, %v653
        %v655 = vpop.f32.mrb[0].mxu0
        %656 = vmatprep.mubr.f32.mxu0 0.0
        %657 = vmatmul.mubr.f32.gmra.mrb[0].mxu0 %v435
        %v658 = vpop.f32.mrb[0].mxu0
        %v659 = vadd.f32 %v338, %v658
        %v660 = vpop.f32.mrb[0].mxu0
        %661 = vdwg.mxu0
        %v662 = vmax.f32 %v504, 0.0
        %v663 = vmax.f32 %v509, 0.0
        %v664 = vmax.f32 %v514, 0.0
        %v665 = vmax.f32 %v519, 0.0
        %v666 = vmax.f32 %v524, 0.0
        %v667 = vmax.f32 %v529, 0.0
        %v668 = vmax.f32 %v534, 0.0
        %v669 = vmax.f32 %v539, 0.0
        %v670 = vmax.f32 %v544, 0.0
        %v671 = vmax.f32 %v549, 0.0
        %v672 = vmax.f32 %v554, 0.0
        %v673 = vmax.f32 %v559, 0.0
        %v674 = vmax.f32 %v564, 0.0
        %v675 = vmax.f32 %v569, 0.0
        %v676 = vmax.f32 %v574, 0.0
        %v677 = vmax.f32 %v579, 0.0
        %v678 = vmax.f32 %v584, 0.0
        %v679 = vmax.f32 %v589, 0.0
        %v680 = vmax.f32 %v594, 0.0
        %v681 = vmax.f32 %v599, 0.0
        %v682 = vmax.f32 %v604, 0.0
        %v683 = vmax.f32 %v609, 0.0
        %v684 = vmax.f32 %v614, 0.0
        %v685 = vmax.f32 %v619, 0.0
        %v686 = vmax.f32 %v624, 0.0
        %v687 = vmax.f32 %v629, 0.0
        %v688 = vmax.f32 %v634, 0.0
        %v689 = vmax.f32 %v639, 0.0
        %v690 = vmax.f32 %v644, 0.0
        %v691 = vmax.f32 %v649, 0.0
        %v692 = vmax.f32 %v654, 0.0
        %v693 = vmax.f32 %v659, 0.0
        %v694 = vld [vmem:[%s3] sm:$0xff]
        %v695 = vld [vmem:[%s3 + $0x8] sm:$0x1]
        %vm696 = vcmask 31744
        %697 = vst.msk [vmem:[#allocation2] sm:$0xff] %vm696, 0.0
        %698 = vst.msk [vmem:[#allocation2 + $0x8] sm:$0xff] %vm696, 0.0
        %vm699 = vcmask 25600
        %700 = vst.msk [vmem:[#allocation2 + $0x10] sm:$0x3] %vm699, 0.0
        %vm701 = vcmask 24576
        %702 = vst.msk [vmem:[#allocation2] sm:$0x1] %vm701, 0.0
        %703 = vst.msk [vmem:[#allocation2 + $0x18] sm:$0x1] %vm701, 0.0
        %704 = vst.msk [vmem:[#allocation2 + $0x30] sm:$0x1] %vm701, 0.0
        %705 = vst.msk [vmem:[#allocation2 + $0x48] sm:$0x1] %vm701, 0.0
        %706 = vst.msk [vmem:[#allocation2 + $0x60] sm:$0x1] %vm701, 0.0
        %707 = vst.msk [vmem:[#allocation2 + $0x78] sm:$0x1] %vm701, 0.0
        %708 = vst.msk [vmem:[#allocation2 + $0x90] sm:$0x1] %vm701, 0.0
        %709 = vst.msk [vmem:[#allocation2 + $0xa8] sm:$0x1] %vm701, 0.0
        %710 = vst.msk [vmem:[#allocation2 + $0xc0] sm:$0x1] %vm701, 0.0
        %711 = vst.msk [vmem:[#allocation2 + $0xd8] sm:$0x1] %vm701, 0.0
        %712 = vst.msk [vmem:[#allocation2 + $0xf0] sm:$0x1] %vm701, 0.0
        %713 = vst.msk [vmem:[#allocation2 + $0x108] sm:$0x1] %vm701, 0.0
        %714 = vst.msk [vmem:[#allocation2 + $0x120] sm:$0x1] %vm701, 0.0
        %715 = vst.msk [vmem:[#allocation2 + $0x138] sm:$0x1] %vm701, 0.0
        %716 = vst.msk [vmem:[#allocation2 + $0x150] sm:$0x1] %vm701, 0.0
        %717 = vst.msk [vmem:[#allocation2 + $0x168] sm:$0x1] %vm701, 0.0
        %718 = vst.msk [vmem:[#allocation2 + $0x180] sm:$0x1] %vm701, 0.0
        %719 = vst.msk [vmem:[#allocation2 + $0x198] sm:$0x1] %vm701, 0.0
        %s720 = scalar_lea.vmem [#allocation2], 408
        %721 = vst.msk [vmem:[%s720] sm:$0xff] %vm696, 0.0
        %722 = vst.msk [vmem:[%s720 + $0x8] sm:$0xff] %vm696, 0.0
        %723 = vst.msk [vmem:[%s720 + $0x10] sm:$0x3] %vm699, 0.0
        %724 = vst.msk [vmem:[#allocation2 + $0x11] sm:$0x1] %vm701, 0.0
        %725 = vst.msk [vmem:[#allocation2 + $0x29] sm:$0x1] %vm701, 0.0
        %726 = vst.msk [vmem:[#allocation2 + $0x41] sm:$0x1] %vm701, 0.0
        %727 = vst.msk [vmem:[#allocation2 + $0x59] sm:$0x1] %vm701, 0.0
        %728 = vst.msk [vmem:[#allocation2 + $0x71] sm:$0x1] %vm701, 0.0
        %729 = vst.msk [vmem:[#allocation2 + $0x89] sm:$0x1] %vm701, 0.0
        %730 = vst.msk [vmem:[#allocation2 + $0xa1] sm:$0x1] %vm701, 0.0
        %731 = vst.msk [vmem:[#allocation2 + $0xb9] sm:$0x1] %vm701, 0.0
        %732 = vst.msk [vmem:[#allocation2 + $0xd1] sm:$0x1] %vm701, 0.0
        %733 = vst.msk [vmem:[#allocation2 + $0xe9] sm:$0x1] %vm701, 0.0
        %734 = vst.msk [vmem:[#allocation2 + $0x101] sm:$0x1] %vm701, 0.0
        %735 = vst.msk [vmem:[#allocation2 + $0x119] sm:$0x1] %vm701, 0.0
        %736 = vst.msk [vmem:[#allocation2 + $0x131] sm:$0x1] %vm701, 0.0
        %737 = vst.msk [vmem:[#allocation2 + $0x149] sm:$0x1] %vm701, 0.0
        %738 = vst.msk [vmem:[#allocation2 + $0x161] sm:$0x1] %vm701, 0.0
        %739 = vst.msk [vmem:[#allocation2 + $0x179] sm:$0x1] %vm701, 0.0
        %740 = vst.msk [vmem:[#allocation2 + $0x191] sm:$0x1] %vm701, 0.0
        %741 = vst.msk [vmem:[#allocation2 + $0x1a9] sm:$0x1] %vm701, 0.0
        %s742 = scalar_lea.vmem [#allocation2], 24
        %743 = vst.msk [vmem:[%s742 + $0x1] sm:$0xff] %vm696, %v662
        %744 = vst.msk [vmem:[%s742 + $0x9] sm:$0xff] %vm696, %v663
        %745 = vst.msk [vmem:[%s742 + $0x19] sm:$0xff] %vm696, %v664
        %746 = vst.msk [vmem:[%s742 + $0x21] sm:$0xff] %vm696, %v665
        %747 = vst.msk [vmem:[%s742 + $0x31] sm:$0xff] %vm696, %v666
        %748 = vst.msk [vmem:[%s742 + $0x39] sm:$0xff] %vm696, %v667
        %749 = vst.msk [vmem:[%s742 + $0x49] sm:$0xff] %vm696, %v668
        %750 = vst.msk [vmem:[%s742 + $0x51] sm:$0xff] %vm696, %v669
        %751 = vst.msk [vmem:[%s742 + $0x61] sm:$0xff] %vm696, %v670
        %752 = vst.msk [vmem:[%s742 + $0x69] sm:$0xff] %vm696, %v671
        %753 = vst.msk [vmem:[%s742 + $0x79] sm:$0xff] %vm696, %v672
        %754 = vst.msk [vmem:[%s742 + $0x81] sm:$0xff] %vm696, %v673
        %755 = vst.msk [vmem:[%s742 + $0x91] sm:$0xff] %vm696, %v674
        %756 = vst.msk [vmem:[%s742 + $0x99] sm:$0xff] %vm696, %v675
        %757 = vst.msk [vmem:[%s742 + $0xa9] sm:$0xff] %vm696, %v676
        %758 = vst.msk [vmem:[%s742 + $0xb1] sm:$0xff] %vm696, %v677
        %759 = vst.msk [vmem:[%s742 + $0xc1] sm:$0xff] %vm696, %v678
        %760 = vst.msk [vmem:[%s742 + $0xc9] sm:$0xff] %vm696, %v679
        %761 = vst.msk [vmem:[%s742 + $0xd9] sm:$0xff] %vm696, %v680
        %762 = vst.msk [vmem:[%s742 + $0xe1] sm:$0xff] %vm696, %v681
        %763 = vst.msk [vmem:[%s742 + $0xf1] sm:$0xff] %vm696, %v682
        %764 = vst.msk [vmem:[%s742 + $0xf9] sm:$0xff] %vm696, %v683
        %765 = vst.msk [vmem:[%s742 + $0x109] sm:$0xff] %vm696, %v684
        %766 = vst.msk [vmem:[%s742 + $0x111] sm:$0xff] %vm696, %v685
        %767 = vst.msk [vmem:[%s742 + $0x121] sm:$0xff] %vm696, %v686
        %768 = vst.msk [vmem:[%s742 + $0x129] sm:$0xff] %vm696, %v687
        %769 = vst.msk [vmem:[%s742 + $0x139] sm:$0xff] %vm696, %v688
        %770 = vst.msk [vmem:[%s742 + $0x141] sm:$0xff] %vm696, %v689
        %771 = vst.msk [vmem:[%s742 + $0x151] sm:$0xff] %vm696, %v690
        %772 = vst.msk [vmem:[%s742 + $0x159] sm:$0xff] %vm696, %v691
        %773 = vst.msk [vmem:[%s742 + $0x169] sm:$0xff] %vm696, %v692
        %774 = vst.msk [vmem:[%s742 + $0x171] sm:$0xff] %vm696, %v693
        %v775 = vld [vmem:[#allocation2] sm:$0xff]
        %v776 = vld [vmem:[#allocation2 + $0x8] sm:$0xff]
        %v777 = vld [vmem:[#allocation2 + $0x10] sm:$0x3]
        %v778 = vld [vmem:[#allocation2 + $0x18] sm:$0xff]
        %v779 = vld [vmem:[#allocation2 + $0x20] sm:$0xff]
        %v780 = vld [vmem:[#allocation2 + $0x28] sm:$0x3]
        %v781 = vld [vmem:[#allocation2 + $0x30] sm:$0xff]
        %v782 = vld [vmem:[#allocation2 + $0x38] sm:$0xff]
        %v783 = vld [vmem:[#allocation2 + $0x40] sm:$0x3]
        %v784 = vld [vmem:[#allocation2 + $0x48] sm:$0xff]
        %v785 = vld [vmem:[#allocation2 + $0x50] sm:$0xff]
        %v786 = vld [vmem:[#allocation2 + $0x58] sm:$0x3]
        %v787 = vld [vmem:[#allocation2 + $0x60] sm:$0xff]
        %v788 = vld [vmem:[#allocation2 + $0x68] sm:$0xff]
        %v789 = vld [vmem:[#allocation2 + $0x70] sm:$0x3]
        %v790 = vld [vmem:[#allocation2 + $0x78] sm:$0xff]
        %v791 = vld [vmem:[#allocation2 + $0x80] sm:$0xff]
        %v792 = vld [vmem:[#allocation2 + $0x88] sm:$0x3]
        %v793 = vld [vmem:[#allocation2 + $0x90] sm:$0xff]
        %v794 = vld [vmem:[#allocation2 + $0x98] sm:$0xff]
        %v795 = vld [vmem:[#allocation2 + $0xa0] sm:$0x3]
        %v796 = vld [vmem:[#allocation2 + $0xa8] sm:$0xff]
        %v797 = vld [vmem:[#allocation2 + $0xb0] sm:$0xff]
        %v798 = vld [vmem:[#allocation2 + $0xb8] sm:$0x3]
        %v799 = vld [vmem:[#allocation2 + $0xc0] sm:$0xff]
        %v800 = vld [vmem:[#allocation2 + $0xc8] sm:$0xff]
        %v801 = vld [vmem:[#allocation2 + $0xd0] sm:$0x3]
        %v802 = vld [vmem:[#allocation2 + $0xd8] sm:$0xff]
        %v803 = vld [vmem:[#allocation2 + $0xe0] sm:$0xff]
        %v804 = vld [vmem:[#allocation2 + $0xe8] sm:$0x3]
        %v805 = vld [vmem:[#allocation2 + $0xf0] sm:$0xff]
        %v806 = vld [vmem:[#allocation2 + $0xf8] sm:$0xff]
        %v807 = vld [vmem:[#allocation2 + $0x100] sm:$0x3]
        %v808 = vld [vmem:[#allocation2 + $0x108] sm:$0xff]
        %v809 = vld [vmem:[#allocation2 + $0x110] sm:$0xff]
        %v810 = vld [vmem:[#allocation2 + $0x118] sm:$0x3]
        %v811 = vld [vmem:[#allocation2 + $0x120] sm:$0xff]
        %v812 = vld [vmem:[#allocation2 + $0x128] sm:$0xff]
        %v813 = vld [vmem:[#allocation2 + $0x130] sm:$0x3]
        %v814 = vld [vmem:[#allocation2 + $0x138] sm:$0xff]
        %v815 = vld [vmem:[#allocation2 + $0x140] sm:$0xff]
        %v816 = vld [vmem:[#allocation2 + $0x148] sm:$0x3]
        %v817 = vld [vmem:[#allocation2 + $0x150] sm:$0xff]
        %v818 = vld [vmem:[#allocation2 + $0x158] sm:$0xff]
        %v819 = vld [vmem:[#allocation2 + $0x160] sm:$0x3]
        %v820 = vld [vmem:[#allocation2 + $0x168] sm:$0xff]
        %v821 = vld [vmem:[#allocation2 + $0x170] sm:$0xff]
        %v822 = vld [vmem:[#allocation2 + $0x178] sm:$0x3]
        %v823 = vld [vmem:[#allocation2 + $0x180] sm:$0xff]
        %v824 = vld [vmem:[#allocation2 + $0x188] sm:$0xff]
        %v825 = vld [vmem:[#allocation2 + $0x190] sm:$0x3]
        %v826 = vld [vmem:[#allocation2 + $0x198] sm:$0xff]
        %v827 = vld [vmem:[#allocation2 + $0x1a0] sm:$0xff]
        %v828 = vld [vmem:[#allocation2 + $0x1a8] sm:$0x3]
        %v829 = vlaneseq
        %v830 = vshrl.u32 %v829, 7
        %v831 = vsub.s32 0, %v830
        %v832 = vrot.slane %v694, %v831
        %v833 = vmul.f32 %v775, %v832
        %v834 = vmul.f32 %v776, %v832
        %v835 = vmul.f32 %v778, %v832
        %v836 = vmul.f32 %v779, %v832
        %v837 = vmul.f32 %v781, %v832
        %v838 = vmul.f32 %v782, %v832
        %v839 = vmul.f32 %v784, %v832
        %v840 = vmul.f32 %v785, %v832
        %v841 = vmul.f32 %v787, %v832
        %v842 = vmul.f32 %v788, %v832
        %v843 = vmul.f32 %v790, %v832
        %v844 = vmul.f32 %v791, %v832
        %v845 = vmul.f32 %v793, %v832
        %v846 = vmul.f32 %v794, %v832
        %v847 = vmul.f32 %v796, %v832
        %v848 = vmul.f32 %v797, %v832
        %v849 = vmul.f32 %v799, %v832
        %v850 = vmul.f32 %v800, %v832
        %v851 = vmul.f32 %v802, %v832
        %v852 = vmul.f32 %v803, %v832
        %v853 = vmul.f32 %v805, %v832
        %v854 = vmul.f32 %v806, %v832
        %v855 = vmul.f32 %v808, %v832
        %v856 = vmul.f32 %v809, %v832
        %v857 = vmul.f32 %v811, %v832
        %v858 = vmul.f32 %v812, %v832
        %v859 = vmul.f32 %v814, %v832
        %v860 = vmul.f32 %v815, %v832
        %v861 = vmul.f32 %v817, %v832
        %v862 = vmul.f32 %v818, %v832
        %v863 = vmul.f32 %v820, %v832
        %v864 = vmul.f32 %v821, %v832
        %v865 = vlaneseq
        %v866 = vshrl.u32 %v865, 7
        %v867 = vsub.s32 1, %v866
        %v868 = vrot.slane %v694, %v867
        %v869 = vmul.f32 %v775, %v868
        %v870 = vmul.f32 %v776, %v868
        %v871 = vmul.f32 %v777, %v868
        %v872 = vmul.f32 %v778, %v868
        %v873 = vmul.f32 %v779, %v868
        %v874 = vmul.f32 %v780, %v868
        %v875 = vmul.f32 %v781, %v868
        %v876 = vmul.f32 %v782, %v868
        %v877 = vmul.f32 %v783, %v868
        %v878 = vmul.f32 %v784, %v868
        %v879 = vmul.f32 %v785, %v868
        %v880 = vmul.f32 %v786, %v868
        %v881 = vmul.f32 %v787, %v868
        %v882 = vmul.f32 %v788, %v868
        %v883 = vmul.f32 %v789, %v868
        %v884 = vmul.f32 %v790, %v868
        %v885 = vmul.f32 %v791, %v868
        %v886 = vmul.f32 %v792, %v868
        %v887 = vmul.f32 %v793, %v868
        %v888 = vmul.f32 %v794, %v868
        %v889 = vmul.f32 %v795, %v868
        %v890 = vmul.f32 %v796, %v868
        %v891 = vmul.f32 %v797, %v868
        %v892 = vmul.f32 %v798, %v868
        %v893 = vmul.f32 %v799, %v868
        %v894 = vmul.f32 %v800, %v868
        %v895 = vmul.f32 %v801, %v868
        %v896 = vmul.f32 %v802, %v868
        %v897 = vmul.f32 %v803, %v868
        %v898 = vmul.f32 %v804, %v868
        %v899 = vmul.f32 %v805, %v868
        %v900 = vmul.f32 %v806, %v868
        %v901 = vmul.f32 %v807, %v868
        %v902 = vmul.f32 %v808, %v868
        %v903 = vmul.f32 %v809, %v868
        %v904 = vmul.f32 %v810, %v868
        %v905 = vmul.f32 %v811, %v868
        %v906 = vmul.f32 %v812, %v868
        %v907 = vmul.f32 %v813, %v868
        %v908 = vmul.f32 %v814, %v868
        %v909 = vmul.f32 %v815, %v868
        %v910 = vmul.f32 %v816, %v868
        %v911 = vmul.f32 %v817, %v868
        %v912 = vmul.f32 %v818, %v868
        %v913 = vmul.f32 %v819, %v868
        %v914 = vmul.f32 %v820, %v868
        %v915 = vmul.f32 %v821, %v868
        %v916 = vmul.f32 %v822, %v868
        %vm965 = vcmask 1046528
        %v966 = vrot.slane %v869, 1
        %v967 = vrot.slane %v870, 1
        %v968 = vsel %vm965, %v966, %v967
        %v969 = vrot.slane %v871, 1
        %v970 = vsel %vm965, %v967, %v969
        %v971 = vrot.slane %v872, 1
        %v972 = vrot.slane %v873, 1
        %v973 = vsel %vm965, %v971, %v972
        %v974 = vrot.slane %v874, 1
        %v975 = vsel %vm965, %v972, %v974
        %v976 = vrot.slane %v875, 1
        %v977 = vrot.slane %v876, 1
        %v978 = vsel %vm965, %v976, %v977
        %v979 = vrot.slane %v877, 1
        %v980 = vsel %vm965, %v977, %v979
        %v981 = vrot.slane %v878, 1
        %v982 = vrot.slane %v879, 1
        %v983 = vsel %vm965, %v981, %v982
        %v984 = vrot.slane %v880, 1
        %v985 = vsel %vm965, %v982, %v984
        %v986 = vrot.slane %v881, 1
        %v987 = vrot.slane %v882, 1
        %v988 = vsel %vm965, %v986, %v987
        %v989 = vrot.slane %v883, 1
        %v990 = vsel %vm965, %v987, %v989
        %v991 = vrot.slane %v884, 1
        %v992 = vrot.slane %v885, 1
        %v993 = vsel %vm965, %v991, %v992
        %v994 = vrot.slane %v886, 1
        %v995 = vsel %vm965, %v992, %v994
        %v996 = vrot.slane %v887, 1
        %v997 = vrot.slane %v888, 1
        %v998 = vsel %vm965, %v996, %v997
        %v999 = vrot.slane %v889, 1
        %v1000 = vsel %vm965, %v997, %v999
        %v1001 = vrot.slane %v890, 1
        %v1002 = vrot.slane %v891, 1
        %v1003 = vsel %vm965, %v1001, %v1002
        %v1004 = vrot.slane %v892, 1
        %v1005 = vsel %vm965, %v1002, %v1004
        %v1006 = vrot.slane %v893, 1
        %v1007 = vrot.slane %v894, 1
        %v1008 = vsel %vm965, %v1006, %v1007
        %v1009 = vrot.slane %v895, 1
        %v1010 = vsel %vm965, %v1007, %v1009
        %v1011 = vrot.slane %v896, 1
        %v1012 = vrot.slane %v897, 1
        %v1013 = vsel %vm965, %v1011, %v1012
        %v1014 = vrot.slane %v898, 1
        %v1015 = vsel %vm965, %v1012, %v1014
        %v1016 = vrot.slane %v899, 1
        %v1017 = vrot.slane %v900, 1
        %v1018 = vsel %vm965, %v1016, %v1017
        %v1019 = vrot.slane %v901, 1
        %v1020 = vsel %vm965, %v1017, %v1019
        %v1021 = vrot.slane %v902, 1
        %v1022 = vrot.slane %v903, 1
        %v1023 = vsel %vm965, %v1021, %v1022
        %v1024 = vrot.slane %v904, 1
        %v1025 = vsel %vm965, %v1022, %v1024
        %v1026 = vrot.slane %v905, 1
        %v1027 = vrot.slane %v906, 1
        %v1028 = vsel %vm965, %v1026, %v1027
        %v1029 = vrot.slane %v907, 1
        %v1030 = vsel %vm965, %v1027, %v1029
        %v1031 = vrot.slane %v908, 1
        %v1032 = vrot.slane %v909, 1
        %v1033 = vsel %vm965, %v1031, %v1032
        %v1034 = vrot.slane %v910, 1
        %v1035 = vsel %vm965, %v1032, %v1034
        %v1036 = vrot.slane %v911, 1
        %v1037 = vrot.slane %v912, 1
        %v1038 = vsel %vm965, %v1036, %v1037
        %v1039 = vrot.slane %v913, 1
        %v1040 = vsel %vm965, %v1037, %v1039
        %v1041 = vrot.slane %v914, 1
        %v1042 = vrot.slane %v915, 1
        %v1043 = vsel %vm965, %v1041, %v1042
        %v1044 = vrot.slane %v916, 1
        %v1045 = vsel %vm965, %v1042, %v1044
        %v1078 = vadd.f32 %v833, %v968
        %v1079 = vadd.f32 %v834, %v970
        %v1080 = vadd.f32 %v835, %v973
        %v1081 = vadd.f32 %v836, %v975
        %v1082 = vadd.f32 %v837, %v978
        %v1083 = vadd.f32 %v838, %v980
        %v1084 = vadd.f32 %v839, %v983
        %v1085 = vadd.f32 %v840, %v985
        %v1086 = vadd.f32 %v841, %v988
        %v1087 = vadd.f32 %v842, %v990
        %v1088 = vadd.f32 %v843, %v993
        %v1089 = vadd.f32 %v844, %v995
        %v1090 = vadd.f32 %v845, %v998
        %v1091 = vadd.f32 %v846, %v1000
        %v1092 = vadd.f32 %v847, %v1003
        %v1093 = vadd.f32 %v848, %v1005
        %v1094 = vadd.f32 %v849, %v1008
        %v1095 = vadd.f32 %v850, %v1010
        %v1096 = vadd.f32 %v851, %v1013
        %v1097 = vadd.f32 %v852, %v1015
        %v1098 = vadd.f32 %v853, %v1018
        %v1099 = vadd.f32 %v854, %v1020
        %v1100 = vadd.f32 %v855, %v1023
        %v1101 = vadd.f32 %v856, %v1025
        %v1102 = vadd.f32 %v857, %v1028
        %v1103 = vadd.f32 %v858, %v1030
        %v1104 = vadd.f32 %v859, %v1033
        %v1105 = vadd.f32 %v860, %v1035
        %v1106 = vadd.f32 %v861, %v1038
        %v1107 = vadd.f32 %v862, %v1040
        %v1108 = vadd.f32 %v863, %v1043
        %v1109 = vadd.f32 %v864, %v1045
        %v1110 = vlaneseq
        %v1111 = vshrl.u32 %v1110, 7
        %v1112 = vsub.s32 2, %v1111
        %v1113 = vrot.slane %v694, %v1112
        %v1114 = vmul.f32 %v775, %v1113
        %v1115 = vmul.f32 %v776, %v1113
        %v1116 = vmul.f32 %v777, %v1113
        %v1117 = vmul.f32 %v778, %v1113
        %v1118 = vmul.f32 %v779, %v1113
        %v1119 = vmul.f32 %v780, %v1113
        %v1120 = vmul.f32 %v781, %v1113
        %v1121 = vmul.f32 %v782, %v1113
        %v1122 = vmul.f32 %v783, %v1113
        %v1123 = vmul.f32 %v784, %v1113
        %v1124 = vmul.f32 %v785, %v1113
        %v1125 = vmul.f32 %v786, %v1113
        %v1126 = vmul.f32 %v787, %v1113
        %v1127 = vmul.f32 %v788, %v1113
        %v1128 = vmul.f32 %v789, %v1113
        %v1129 = vmul.f32 %v790, %v1113
        %v1130 = vmul.f32 %v791, %v1113
        %v1131 = vmul.f32 %v792, %v1113
        %v1132 = vmul.f32 %v793, %v1113
        %v1133 = vmul.f32 %v794, %v1113
        %v1134 = vmul.f32 %v795, %v1113
        %v1135 = vmul.f32 %v796, %v1113
        %v1136 = vmul.f32 %v797, %v1113
        %v1137 = vmul.f32 %v798, %v1113
        %v1138 = vmul.f32 %v799, %v1113
        %v1139 = vmul.f32 %v800, %v1113
        %v1140 = vmul.f32 %v801, %v1113
        %v1141 = vmul.f32 %v802, %v1113
        %v1142 = vmul.f32 %v803, %v1113
        %v1143 = vmul.f32 %v804, %v1113
        %v1144 = vmul.f32 %v805, %v1113
        %v1145 = vmul.f32 %v806, %v1113
        %v1146 = vmul.f32 %v807, %v1113
        %v1147 = vmul.f32 %v808, %v1113
        %v1148 = vmul.f32 %v809, %v1113
        %v1149 = vmul.f32 %v810, %v1113
        %v1150 = vmul.f32 %v811, %v1113
        %v1151 = vmul.f32 %v812, %v1113
        %v1152 = vmul.f32 %v813, %v1113
        %v1153 = vmul.f32 %v814, %v1113
        %v1154 = vmul.f32 %v815, %v1113
        %v1155 = vmul.f32 %v816, %v1113
        %v1156 = vmul.f32 %v817, %v1113
        %v1157 = vmul.f32 %v818, %v1113
        %v1158 = vmul.f32 %v819, %v1113
        %v1159 = vmul.f32 %v820, %v1113
        %v1160 = vmul.f32 %v821, %v1113
        %v1161 = vmul.f32 %v822, %v1113
        %vm1210 = vcmask 1045504
        %v1211 = vrot.slane %v1114, 2
        %v1212 = vrot.slane %v1115, 2
        %v1213 = vsel %vm1210, %v1211, %v1212
        %v1214 = vrot.slane %v1116, 2
        %v1215 = vsel %vm1210, %v1212, %v1214
        %v1216 = vrot.slane %v1117, 2
        %v1217 = vrot.slane %v1118, 2
        %v1218 = vsel %vm1210, %v1216, %v1217
        %v1219 = vrot.slane %v1119, 2
        %v1220 = vsel %vm1210, %v1217, %v1219
        %v1221 = vrot.slane %v1120, 2
        %v1222 = vrot.slane %v1121, 2
        %v1223 = vsel %vm1210, %v1221, %v1222
        %v1224 = vrot.slane %v1122, 2
        %v1225 = vsel %vm1210, %v1222, %v1224
        %v1226 = vrot.slane %v1123, 2
        %v1227 = vrot.slane %v1124, 2
        %v1228 = vsel %vm1210, %v1226, %v1227
        %v1229 = vrot.slane %v1125, 2
        %v1230 = vsel %vm1210, %v1227, %v1229
        %v1231 = vrot.slane %v1126, 2
        %v1232 = vrot.slane %v1127, 2
        %v1233 = vsel %vm1210, %v1231, %v1232
        %v1234 = vrot.slane %v1128, 2
        %v1235 = vsel %vm1210, %v1232, %v1234
        %v1236 = vrot.slane %v1129, 2
        %v1237 = vrot.slane %v1130, 2
        %v1238 = vsel %vm1210, %v1236, %v1237
        %v1239 = vrot.slane %v1131, 2
        %v1240 = vsel %vm1210, %v1237, %v1239
        %v1241 = vrot.slane %v1132, 2
        %v1242 = vrot.slane %v1133, 2
        %v1243 = vsel %vm1210, %v1241, %v1242
        %v1244 = vrot.slane %v1134, 2
        %v1245 = vsel %vm1210, %v1242, %v1244
        %v1246 = vrot.slane %v1135, 2
        %v1247 = vrot.slane %v1136, 2
        %v1248 = vsel %vm1210, %v1246, %v1247
        %v1249 = vrot.slane %v1137, 2
        %v1250 = vsel %vm1210, %v1247, %v1249
        %v1251 = vrot.slane %v1138, 2
        %v1252 = vrot.slane %v1139, 2
        %v1253 = vsel %vm1210, %v1251, %v1252
        %v1254 = vrot.slane %v1140, 2
        %v1255 = vsel %vm1210, %v1252, %v1254
        %v1256 = vrot.slane %v1141, 2
        %v1257 = vrot.slane %v1142, 2
        %v1258 = vsel %vm1210, %v1256, %v1257
        %v1259 = vrot.slane %v1143, 2
        %v1260 = vsel %vm1210, %v1257, %v1259
        %v1261 = vrot.slane %v1144, 2
        %v1262 = vrot.slane %v1145, 2
        %v1263 = vsel %vm1210, %v1261, %v1262
        %v1264 = vrot.slane %v1146, 2
        %v1265 = vsel %vm1210, %v1262, %v1264
        %v1266 = vrot.slane %v1147, 2
        %v1267 = vrot.slane %v1148, 2
        %v1268 = vsel %vm1210, %v1266, %v1267
        %v1269 = vrot.slane %v1149, 2
        %v1270 = vsel %vm1210, %v1267, %v1269
        %v1271 = vrot.slane %v1150, 2
        %v1272 = vrot.slane %v1151, 2
        %v1273 = vsel %vm1210, %v1271, %v1272
        %v1274 = vrot.slane %v1152, 2
        %v1275 = vsel %vm1210, %v1272, %v1274
        %v1276 = vrot.slane %v1153, 2
        %v1277 = vrot.slane %v1154, 2
        %v1278 = vsel %vm1210, %v1276, %v1277
        %v1279 = vrot.slane %v1155, 2
        %v1280 = vsel %vm1210, %v1277, %v1279
        %v1281 = vrot.slane %v1156, 2
        %v1282 = vrot.slane %v1157, 2
        %v1283 = vsel %vm1210, %v1281, %v1282
        %v1284 = vrot.slane %v1158, 2
        %v1285 = vsel %vm1210, %v1282, %v1284
        %v1286 = vrot.slane %v1159, 2
        %v1287 = vrot.slane %v1160, 2
        %v1288 = vsel %vm1210, %v1286, %v1287
        %v1289 = vrot.slane %v1161, 2
        %v1290 = vsel %vm1210, %v1287, %v1289
        %v1323 = vadd.f32 %v1078, %v1213
        %v1324 = vadd.f32 %v1079, %v1215
        %v1325 = vadd.f32 %v1080, %v1218
        %v1326 = vadd.f32 %v1081, %v1220
        %v1327 = vadd.f32 %v1082, %v1223
        %v1328 = vadd.f32 %v1083, %v1225
        %v1329 = vadd.f32 %v1084, %v1228
        %v1330 = vadd.f32 %v1085, %v1230
        %v1331 = vadd.f32 %v1086, %v1233
        %v1332 = vadd.f32 %v1087, %v1235
        %v1333 = vadd.f32 %v1088, %v1238
        %v1334 = vadd.f32 %v1089, %v1240
        %v1335 = vadd.f32 %v1090, %v1243
        %v1336 = vadd.f32 %v1091, %v1245
        %v1337 = vadd.f32 %v1092, %v1248
        %v1338 = vadd.f32 %v1093, %v1250
        %v1339 = vadd.f32 %v1094, %v1253
        %v1340 = vadd.f32 %v1095, %v1255
        %v1341 = vadd.f32 %v1096, %v1258
        %v1342 = vadd.f32 %v1097, %v1260
        %v1343 = vadd.f32 %v1098, %v1263
        %v1344 = vadd.f32 %v1099, %v1265
        %v1345 = vadd.f32 %v1100, %v1268
        %v1346 = vadd.f32 %v1101, %v1270
        %v1347 = vadd.f32 %v1102, %v1273
        %v1348 = vadd.f32 %v1103, %v1275
        %v1349 = vadd.f32 %v1104, %v1278
        %v1350 = vadd.f32 %v1105, %v1280
        %v1351 = vadd.f32 %v1106, %v1283
        %v1352 = vadd.f32 %v1107, %v1285
        %v1353 = vadd.f32 %v1108, %v1288
        %v1354 = vadd.f32 %v1109, %v1290
        %v1355 = vlaneseq
        %v1356 = vshrl.u32 %v1355, 7
        %v1357 = vsub.s32 3, %v1356
        %v1358 = vrot.slane %v694, %v1357
        %v1359 = vmul.f32 %v778, %v1358
        %v1360 = vmul.f32 %v779, %v1358
        %v1361 = vmul.f32 %v781, %v1358
        %v1362 = vmul.f32 %v782, %v1358
        %v1363 = vmul.f32 %v784, %v1358
        %v1364 = vmul.f32 %v785, %v1358
        %v1365 = vmul.f32 %v787, %v1358
        %v1366 = vmul.f32 %v788, %v1358
        %v1367 = vmul.f32 %v790, %v1358
        %v1368 = vmul.f32 %v791, %v1358
        %v1369 = vmul.f32 %v793, %v1358
        %v1370 = vmul.f32 %v794, %v1358
        %v1371 = vmul.f32 %v796, %v1358
        %v1372 = vmul.f32 %v797, %v1358
        %v1373 = vmul.f32 %v799, %v1358
        %v1374 = vmul.f32 %v800, %v1358
        %v1375 = vmul.f32 %v802, %v1358
        %v1376 = vmul.f32 %v803, %v1358
        %v1377 = vmul.f32 %v805, %v1358
        %v1378 = vmul.f32 %v806, %v1358
        %v1379 = vmul.f32 %v808, %v1358
        %v1380 = vmul.f32 %v809, %v1358
        %v1381 = vmul.f32 %v811, %v1358
        %v1382 = vmul.f32 %v812, %v1358
        %v1383 = vmul.f32 %v814, %v1358
        %v1384 = vmul.f32 %v815, %v1358
        %v1385 = vmul.f32 %v817, %v1358
        %v1386 = vmul.f32 %v818, %v1358
        %v1387 = vmul.f32 %v820, %v1358
        %v1388 = vmul.f32 %v821, %v1358
        %v1389 = vmul.f32 %v823, %v1358
        %v1390 = vmul.f32 %v824, %v1358
        %v1391 = vadd.f32 %v1323, %v1359
        %v1392 = vadd.f32 %v1324, %v1360
        %v1393 = vadd.f32 %v1325, %v1361
        %v1394 = vadd.f32 %v1326, %v1362
        %v1395 = vadd.f32 %v1327, %v1363
        %v1396 = vadd.f32 %v1328, %v1364
        %v1397 = vadd.f32 %v1329, %v1365
        %v1398 = vadd.f32 %v1330, %v1366
        %v1399 = vadd.f32 %v1331, %v1367
        %v1400 = vadd.f32 %v1332, %v1368
        %v1401 = vadd.f32 %v1333, %v1369
        %v1402 = vadd.f32 %v1334, %v1370
        %v1403 = vadd.f32 %v1335, %v1371
        %v1404 = vadd.f32 %v1336, %v1372
        %v1405 = vadd.f32 %v1337, %v1373
        %v1406 = vadd.f32 %v1338, %v1374
        %v1407 = vadd.f32 %v1339, %v1375
        %v1408 = vadd.f32 %v1340, %v1376
        %v1409 = vadd.f32 %v1341, %v1377
        %v1410 = vadd.f32 %v1342, %v1378
        %v1411 = vadd.f32 %v1343, %v1379
        %v1412 = vadd.f32 %v1344, %v1380
        %v1413 = vadd.f32 %v1345, %v1381
        %v1414 = vadd.f32 %v1346, %v1382
        %v1415 = vadd.f32 %v1347, %v1383
        %v1416 = vadd.f32 %v1348, %v1384
        %v1417 = vadd.f32 %v1349, %v1385
        %v1418 = vadd.f32 %v1350, %v1386
        %v1419 = vadd.f32 %v1351, %v1387
        %v1420 = vadd.f32 %v1352, %v1388
        %v1421 = vadd.f32 %v1353, %v1389
        %v1422 = vadd.f32 %v1354, %v1390
        %v1423 = vlaneseq
        %v1424 = vshrl.u32 %v1423, 7
        %v1425 = vsub.s32 4, %v1424
        %v1426 = vrot.slane %v694, %v1425
        %v1427 = vmul.f32 %v778, %v1426
        %v1428 = vmul.f32 %v779, %v1426
        %v1429 = vmul.f32 %v780, %v1426
        %v1430 = vmul.f32 %v781, %v1426
        %v1431 = vmul.f32 %v782, %v1426
        %v1432 = vmul.f32 %v783, %v1426
        %v1433 = vmul.f32 %v784, %v1426
        %v1434 = vmul.f32 %v785, %v1426
        %v1435 = vmul.f32 %v786, %v1426
        %v1436 = vmul.f32 %v787, %v1426
        %v1437 = vmul.f32 %v788, %v1426
        %v1438 = vmul.f32 %v789, %v1426
        %v1439 = vmul.f32 %v790, %v1426
        %v1440 = vmul.f32 %v791, %v1426
        %v1441 = vmul.f32 %v792, %v1426
        %v1442 = vmul.f32 %v793, %v1426
        %v1443 = vmul.f32 %v794, %v1426
        %v1444 = vmul.f32 %v795, %v1426
        %v1445 = vmul.f32 %v796, %v1426
        %v1446 = vmul.f32 %v797, %v1426
        %v1447 = vmul.f32 %v798, %v1426
        %v1448 = vmul.f32 %v799, %v1426
        %v1449 = vmul.f32 %v800, %v1426
        %v1450 = vmul.f32 %v801, %v1426
        %v1451 = vmul.f32 %v802, %v1426
        %v1452 = vmul.f32 %v803, %v1426
        %v1453 = vmul.f32 %v804, %v1426
        %v1454 = vmul.f32 %v805, %v1426
        %v1455 = vmul.f32 %v806, %v1426
        %v1456 = vmul.f32 %v807, %v1426
        %v1457 = vmul.f32 %v808, %v1426
        %v1458 = vmul.f32 %v809, %v1426
        %v1459 = vmul.f32 %v810, %v1426
        %v1460 = vmul.f32 %v811, %v1426
        %v1461 = vmul.f32 %v812, %v1426
        %v1462 = vmul.f32 %v813, %v1426
        %v1463 = vmul.f32 %v814, %v1426
        %v1464 = vmul.f32 %v815, %v1426
        %v1465 = vmul.f32 %v816, %v1426
        %v1466 = vmul.f32 %v817, %v1426
        %v1467 = vmul.f32 %v818, %v1426
        %v1468 = vmul.f32 %v819, %v1426
        %v1469 = vmul.f32 %v820, %v1426
        %v1470 = vmul.f32 %v821, %v1426
        %v1471 = vmul.f32 %v822, %v1426
        %v1472 = vmul.f32 %v823, %v1426
        %v1473 = vmul.f32 %v824, %v1426
        %v1474 = vmul.f32 %v825, %v1426
        %v1523 = vrot.slane %v1427, 1
        %v1524 = vrot.slane %v1428, 1
        %v1525 = vsel %vm965, %v1523, %v1524
        %v1526 = vrot.slane %v1429, 1
        %v1527 = vsel %vm965, %v1524, %v1526
        %v1528 = vrot.slane %v1430, 1
        %v1529 = vrot.slane %v1431, 1
        %v1530 = vsel %vm965, %v1528, %v1529
        %v1531 = vrot.slane %v1432, 1
        %v1532 = vsel %vm965, %v1529, %v1531
        %v1533 = vrot.slane %v1433, 1
        %v1534 = vrot.slane %v1434, 1
        %v1535 = vsel %vm965, %v1533, %v1534
        %v1536 = vrot.slane %v1435, 1
        %v1537 = vsel %vm965, %v1534, %v1536
        %v1538 = vrot.slane %v1436, 1
        %v1539 = vrot.slane %v1437, 1
        %v1540 = vsel %vm965, %v1538, %v1539
        %v1541 = vrot.slane %v1438, 1
        %v1542 = vsel %vm965, %v1539, %v1541
        %v1543 = vrot.slane %v1439, 1
        %v1544 = vrot.slane %v1440, 1
        %v1545 = vsel %vm965, %v1543, %v1544
        %v1546 = vrot.slane %v1441, 1
        %v1547 = vsel %vm965, %v1544, %v1546
        %v1548 = vrot.slane %v1442, 1
        %v1549 = vrot.slane %v1443, 1
        %v1550 = vsel %vm965, %v1548, %v1549
        %v1551 = vrot.slane %v1444, 1
        %v1552 = vsel %vm965, %v1549, %v1551
        %v1553 = vrot.slane %v1445, 1
        %v1554 = vrot.slane %v1446, 1
        %v1555 = vsel %vm965, %v1553, %v1554
        %v1556 = vrot.slane %v1447, 1
        %v1557 = vsel %vm965, %v1554, %v1556
        %v1558 = vrot.slane %v1448, 1
        %v1559 = vrot.slane %v1449, 1
        %v1560 = vsel %vm965, %v1558, %v1559
        %v1561 = vrot.slane %v1450, 1
        %v1562 = vsel %vm965, %v1559, %v1561
        %v1563 = vrot.slane %v1451, 1
        %v1564 = vrot.slane %v1452, 1
        %v1565 = vsel %vm965, %v1563, %v1564
        %v1566 = vrot.slane %v1453, 1
        %v1567 = vsel %vm965, %v1564, %v1566
        %v1568 = vrot.slane %v1454, 1
        %v1569 = vrot.slane %v1455, 1
        %v1570 = vsel %vm965, %v1568, %v1569
        %v1571 = vrot.slane %v1456, 1
        %v1572 = vsel %vm965, %v1569, %v1571
        %v1573 = vrot.slane %v1457, 1
        %v1574 = vrot.slane %v1458, 1
        %v1575 = vsel %vm965, %v1573, %v1574
        %v1576 = vrot.slane %v1459, 1
        %v1577 = vsel %vm965, %v1574, %v1576
        %v1578 = vrot.slane %v1460, 1
        %v1579 = vrot.slane %v1461, 1
        %v1580 = vsel %vm965, %v1578, %v1579
        %v1581 = vrot.slane %v1462, 1
        %v1582 = vsel %vm965, %v1579, %v1581
        %v1583 = vrot.slane %v1463, 1
        %v1584 = vrot.slane %v1464, 1
        %v1585 = vsel %vm965, %v1583, %v1584
        %v1586 = vrot.slane %v1465, 1
        %v1587 = vsel %vm965, %v1584, %v1586
        %v1588 = vrot.slane %v1466, 1
        %v1589 = vrot.slane %v1467, 1
        %v1590 = vsel %vm965, %v1588, %v1589
        %v1591 = vrot.slane %v1468, 1
        %v1592 = vsel %vm965, %v1589, %v1591
        %v1593 = vrot.slane %v1469, 1
        %v1594 = vrot.slane %v1470, 1
        %v1595 = vsel %vm965, %v1593, %v1594
        %v1596 = vrot.slane %v1471, 1
        %v1597 = vsel %vm965, %v1594, %v1596
        %v1598 = vrot.slane %v1472, 1
        %v1599 = vrot.slane %v1473, 1
        %v1600 = vsel %vm965, %v1598, %v1599
        %v1601 = vrot.slane %v1474, 1
        %v1602 = vsel %vm965, %v1599, %v1601
        %v1635 = vadd.f32 %v1391, %v1525
        %v1636 = vadd.f32 %v1392, %v1527
        %v1637 = vadd.f32 %v1393, %v1530
        %v1638 = vadd.f32 %v1394, %v1532
        %v1639 = vadd.f32 %v1395, %v1535
        %v1640 = vadd.f32 %v1396, %v1537
        %v1641 = vadd.f32 %v1397, %v1540
        %v1642 = vadd.f32 %v1398, %v1542
        %v1643 = vadd.f32 %v1399, %v1545
        %v1644 = vadd.f32 %v1400, %v1547
        %v1645 = vadd.f32 %v1401, %v1550
        %v1646 = vadd.f32 %v1402, %v1552
        %v1647 = vadd.f32 %v1403, %v1555
        %v1648 = vadd.f32 %v1404, %v1557
        %v1649 = vadd.f32 %v1405, %v1560
        %v1650 = vadd.f32 %v1406, %v1562
        %v1651 = vadd.f32 %v1407, %v1565
        %v1652 = vadd.f32 %v1408, %v1567
        %v1653 = vadd.f32 %v1409, %v1570
        %v1654 = vadd.f32 %v1410, %v1572
        %v1655 = vadd.f32 %v1411, %v1575
        %v1656 = vadd.f32 %v1412, %v1577
        %v1657 = vadd.f32 %v1413, %v1580
        %v1658 = vadd.f32 %v1414, %v1582
        %v1659 = vadd.f32 %v1415, %v1585
        %v1660 = vadd.f32 %v1416, %v1587
        %v1661 = vadd.f32 %v1417, %v1590
        %v1662 = vadd.f32 %v1418, %v1592
        %v1663 = vadd.f32 %v1419, %v1595
        %v1664 = vadd.f32 %v1420, %v1597
        %v1665 = vadd.f32 %v1421, %v1600
        %v1666 = vadd.f32 %v1422, %v1602
        %v1667 = vlaneseq
        %v1668 = vshrl.u32 %v1667, 7
        %v1669 = vsub.s32 5, %v1668
        %v1670 = vrot.slane %v694, %v1669
        %v1671 = vmul.f32 %v778, %v1670
        %v1672 = vmul.f32 %v779, %v1670
        %v1673 = vmul.f32 %v780, %v1670
        %v1674 = vmul.f32 %v781, %v1670
        %v1675 = vmul.f32 %v782, %v1670
        %v1676 = vmul.f32 %v783, %v1670
        %v1677 = vmul.f32 %v784, %v1670
        %v1678 = vmul.f32 %v785, %v1670
        %v1679 = vmul.f32 %v786, %v1670
        %v1680 = vmul.f32 %v787, %v1670
        %v1681 = vmul.f32 %v788, %v1670
        %v1682 = vmul.f32 %v789, %v1670
        %v1683 = vmul.f32 %v790, %v1670
        %v1684 = vmul.f32 %v791, %v1670
        %v1685 = vmul.f32 %v792, %v1670
        %v1686 = vmul.f32 %v793, %v1670
        %v1687 = vmul.f32 %v794, %v1670
        %v1688 = vmul.f32 %v795, %v1670
        %v1689 = vmul.f32 %v796, %v1670
        %v1690 = vmul.f32 %v797, %v1670
        %v1691 = vmul.f32 %v798, %v1670
        %v1692 = vmul.f32 %v799, %v1670
        %v1693 = vmul.f32 %v800, %v1670
        %v1694 = vmul.f32 %v801, %v1670
        %v1695 = vmul.f32 %v802, %v1670
        %v1696 = vmul.f32 %v803, %v1670
        %v1697 = vmul.f32 %v804, %v1670
        %v1698 = vmul.f32 %v805, %v1670
        %v1699 = vmul.f32 %v806, %v1670
        %v1700 = vmul.f32 %v807, %v1670
        %v1701 = vmul.f32 %v808, %v1670
        %v1702 = vmul.f32 %v809, %v1670
        %v1703 = vmul.f32 %v810, %v1670
        %v1704 = vmul.f32 %v811, %v1670
        %v1705 = vmul.f32 %v812, %v1670
        %v1706 = vmul.f32 %v813, %v1670
        %v1707 = vmul.f32 %v814, %v1670
        %v1708 = vmul.f32 %v815, %v1670
        %v1709 = vmul.f32 %v816, %v1670
        %v1710 = vmul.f32 %v817, %v1670
        %v1711 = vmul.f32 %v818, %v1670
        %v1712 = vmul.f32 %v819, %v1670
        %v1713 = vmul.f32 %v820, %v1670
        %v1714 = vmul.f32 %v821, %v1670
        %v1715 = vmul.f32 %v822, %v1670
        %v1716 = vmul.f32 %v823, %v1670
        %v1717 = vmul.f32 %v824, %v1670
        %v1718 = vmul.f32 %v825, %v1670
        %v1767 = vrot.slane %v1671, 2
        %v1768 = vrot.slane %v1672, 2
        %v1769 = vsel %vm1210, %v1767, %v1768
        %v1770 = vrot.slane %v1673, 2
        %v1771 = vsel %vm1210, %v1768, %v1770
        %v1772 = vrot.slane %v1674, 2
        %v1773 = vrot.slane %v1675, 2
        %v1774 = vsel %vm1210, %v1772, %v1773
        %v1775 = vrot.slane %v1676, 2
        %v1776 = vsel %vm1210, %v1773, %v1775
        %v1777 = vrot.slane %v1677, 2
        %v1778 = vrot.slane %v1678, 2
        %v1779 = vsel %vm1210, %v1777, %v1778
        %v1780 = vrot.slane %v1679, 2
        %v1781 = vsel %vm1210, %v1778, %v1780
        %v1782 = vrot.slane %v1680, 2
        %v1783 = vrot.slane %v1681, 2
        %v1784 = vsel %vm1210, %v1782, %v1783
        %v1785 = vrot.slane %v1682, 2
        %v1786 = vsel %vm1210, %v1783, %v1785
        %v1787 = vrot.slane %v1683, 2
        %v1788 = vrot.slane %v1684, 2
        %v1789 = vsel %vm1210, %v1787, %v1788
        %v1790 = vrot.slane %v1685, 2
        %v1791 = vsel %vm1210, %v1788, %v1790
        %v1792 = vrot.slane %v1686, 2
        %v1793 = vrot.slane %v1687, 2
        %v1794 = vsel %vm1210, %v1792, %v1793
        %v1795 = vrot.slane %v1688, 2
        %v1796 = vsel %vm1210, %v1793, %v1795
        %v1797 = vrot.slane %v1689, 2
        %v1798 = vrot.slane %v1690, 2
        %v1799 = vsel %vm1210, %v1797, %v1798
        %v1800 = vrot.slane %v1691, 2
        %v1801 = vsel %vm1210, %v1798, %v1800
        %v1802 = vrot.slane %v1692, 2
        %v1803 = vrot.slane %v1693, 2
        %v1804 = vsel %vm1210, %v1802, %v1803
        %v1805 = vrot.slane %v1694, 2
        %v1806 = vsel %vm1210, %v1803, %v1805
        %v1807 = vrot.slane %v1695, 2
        %v1808 = vrot.slane %v1696, 2
        %v1809 = vsel %vm1210, %v1807, %v1808
        %v1810 = vrot.slane %v1697, 2
        %v1811 = vsel %vm1210, %v1808, %v1810
        %v1812 = vrot.slane %v1698, 2
        %v1813 = vrot.slane %v1699, 2
        %v1814 = vsel %vm1210, %v1812, %v1813
        %v1815 = vrot.slane %v1700, 2
        %v1816 = vsel %vm1210, %v1813, %v1815
        %v1817 = vrot.slane %v1701, 2
        %v1818 = vrot.slane %v1702, 2
        %v1819 = vsel %vm1210, %v1817, %v1818
        %v1820 = vrot.slane %v1703, 2
        %v1821 = vsel %vm1210, %v1818, %v1820
        %v1822 = vrot.slane %v1704, 2
        %v1823 = vrot.slane %v1705, 2
        %v1824 = vsel %vm1210, %v1822, %v1823
        %v1825 = vrot.slane %v1706, 2
        %v1826 = vsel %vm1210, %v1823, %v1825
        %v1827 = vrot.slane %v1707, 2
        %v1828 = vrot.slane %v1708, 2
        %v1829 = vsel %vm1210, %v1827, %v1828
        %v1830 = vrot.slane %v1709, 2
        %v1831 = vsel %vm1210, %v1828, %v1830
        %v1832 = vrot.slane %v1710, 2
        %v1833 = vrot.slane %v1711, 2
        %v1834 = vsel %vm1210, %v1832, %v1833
        %v1835 = vrot.slane %v1712, 2
        %v1836 = vsel %vm1210, %v1833, %v1835
        %v1837 = vrot.slane %v1713, 2
        %v1838 = vrot.slane %v1714, 2
        %v1839 = vsel %vm1210, %v1837, %v1838
        %v1840 = vrot.slane %v1715, 2
        %v1841 = vsel %vm1210, %v1838, %v1840
        %v1842 = vrot.slane %v1716, 2
        %v1843 = vrot.slane %v1717, 2
        %v1844 = vsel %vm1210, %v1842, %v1843
        %v1845 = vrot.slane %v1718, 2
        %v1846 = vsel %vm1210, %v1843, %v1845
        %v1879 = vadd.f32 %v1635, %v1769
        %v1880 = vadd.f32 %v1636, %v1771
        %v1881 = vadd.f32 %v1637, %v1774
        %v1882 = vadd.f32 %v1638, %v1776
        %v1883 = vadd.f32 %v1639, %v1779
        %v1884 = vadd.f32 %v1640, %v1781
        %v1885 = vadd.f32 %v1641, %v1784
        %v1886 = vadd.f32 %v1642, %v1786
        %v1887 = vadd.f32 %v1643, %v1789
        %v1888 = vadd.f32 %v1644, %v1791
        %v1889 = vadd.f32 %v1645, %v1794
        %v1890 = vadd.f32 %v1646, %v1796
        %v1891 = vadd.f32 %v1647, %v1799
        %v1892 = vadd.f32 %v1648, %v1801
        %v1893 = vadd.f32 %v1649, %v1804
        %v1894 = vadd.f32 %v1650, %v1806
        %v1895 = vadd.f32 %v1651, %v1809
        %v1896 = vadd.f32 %v1652, %v1811
        %v1897 = vadd.f32 %v1653, %v1814
        %v1898 = vadd.f32 %v1654, %v1816
        %v1899 = vadd.f32 %v1655, %v1819
        %v1900 = vadd.f32 %v1656, %v1821
        %v1901 = vadd.f32 %v1657, %v1824
        %v1902 = vadd.f32 %v1658, %v1826
        %v1903 = vadd.f32 %v1659, %v1829
        %v1904 = vadd.f32 %v1660, %v1831
        %v1905 = vadd.f32 %v1661, %v1834
        %v1906 = vadd.f32 %v1662, %v1836
        %v1907 = vadd.f32 %v1663, %v1839
        %v1908 = vadd.f32 %v1664, %v1841
        %v1909 = vadd.f32 %v1665, %v1844
        %v1910 = vadd.f32 %v1666, %v1846
        %v1911 = vlaneseq
        %v1912 = vshrl.u32 %v1911, 7
        %v1913 = vsub.s32 6, %v1912
        %v1914 = vrot.slane %v694, %v1913
        %v1915 = vmul.f32 %v781, %v1914
        %v1916 = vmul.f32 %v782, %v1914
        %v1917 = vmul.f32 %v784, %v1914
        %v1918 = vmul.f32 %v785, %v1914
        %v1919 = vmul.f32 %v787, %v1914
        %v1920 = vmul.f32 %v788, %v1914
        %v1921 = vmul.f32 %v790, %v1914
        %v1922 = vmul.f32 %v791, %v1914
        %v1923 = vmul.f32 %v793, %v1914
        %v1924 = vmul.f32 %v794, %v1914
        %v1925 = vmul.f32 %v796, %v1914
        %v1926 = vmul.f32 %v797, %v1914
        %v1927 = vmul.f32 %v799, %v1914
        %v1928 = vmul.f32 %v800, %v1914
        %v1929 = vmul.f32 %v802, %v1914
        %v1930 = vmul.f32 %v803, %v1914
        %v1931 = vmul.f32 %v805, %v1914
        %v1932 = vmul.f32 %v806, %v1914
        %v1933 = vmul.f32 %v808, %v1914
        %v1934 = vmul.f32 %v809, %v1914
        %v1935 = vmul.f32 %v811, %v1914
        %v1936 = vmul.f32 %v812, %v1914
        %v1937 = vmul.f32 %v814, %v1914
        %v1938 = vmul.f32 %v815, %v1914
        %v1939 = vmul.f32 %v817, %v1914
        %v1940 = vmul.f32 %v818, %v1914
        %v1941 = vmul.f32 %v820, %v1914
        %v1942 = vmul.f32 %v821, %v1914
        %v1943 = vmul.f32 %v823, %v1914
        %v1944 = vmul.f32 %v824, %v1914
        %v1945 = vmul.f32 %v826, %v1914
        %v1946 = vmul.f32 %v827, %v1914
        %v1947 = vadd.f32 %v1879, %v1915
        %v1948 = vadd.f32 %v1880, %v1916
        %v1949 = vadd.f32 %v1881, %v1917
        %v1950 = vadd.f32 %v1882, %v1918
        %v1951 = vadd.f32 %v1883, %v1919
        %v1952 = vadd.f32 %v1884, %v1920
        %v1953 = vadd.f32 %v1885, %v1921
        %v1954 = vadd.f32 %v1886, %v1922
        %v1955 = vadd.f32 %v1887, %v1923
        %v1956 = vadd.f32 %v1888, %v1924
        %v1957 = vadd.f32 %v1889, %v1925
        %v1958 = vadd.f32 %v1890, %v1926
        %v1959 = vadd.f32 %v1891, %v1927
        %v1960 = vadd.f32 %v1892, %v1928
        %v1961 = vadd.f32 %v1893, %v1929
        %v1962 = vadd.f32 %v1894, %v1930
        %v1963 = vadd.f32 %v1895, %v1931
        %v1964 = vadd.f32 %v1896, %v1932
        %v1965 = vadd.f32 %v1897, %v1933
        %v1966 = vadd.f32 %v1898, %v1934
        %v1967 = vadd.f32 %v1899, %v1935
        %v1968 = vadd.f32 %v1900, %v1936
        %v1969 = vadd.f32 %v1901, %v1937
        %v1970 = vadd.f32 %v1902, %v1938
        %v1971 = vadd.f32 %v1903, %v1939
        %v1972 = vadd.f32 %v1904, %v1940
        %v1973 = vadd.f32 %v1905, %v1941
        %v1974 = vadd.f32 %v1906, %v1942
        %v1975 = vadd.f32 %v1907, %v1943
        %v1976 = vadd.f32 %v1908, %v1944
        %v1977 = vadd.f32 %v1909, %v1945
        %v1978 = vadd.f32 %v1910, %v1946
        %v1979 = vlaneseq
        %v1980 = vshrl.u32 %v1979, 7
        %v1981 = vsub.s32 7, %v1980
        %v1982 = vrot.slane %v694, %v1981
        %v1983 = vmul.f32 %v781, %v1982
        %v1984 = vmul.f32 %v782, %v1982
        %v1985 = vmul.f32 %v783, %v1982
        %v1986 = vmul.f32 %v784, %v1982
        %v1987 = vmul.f32 %v785, %v1982
        %v1988 = vmul.f32 %v786, %v1982
        %v1989 = vmul.f32 %v787, %v1982
        %v1990 = vmul.f32 %v788, %v1982
        %v1991 = vmul.f32 %v789, %v1982
        %v1992 = vmul.f32 %v790, %v1982
        %v1993 = vmul.f32 %v791, %v1982
        %v1994 = vmul.f32 %v792, %v1982
        %v1995 = vmul.f32 %v793, %v1982
        %v1996 = vmul.f32 %v794, %v1982
        %v1997 = vmul.f32 %v795, %v1982
        %v1998 = vmul.f32 %v796, %v1982
        %v1999 = vmul.f32 %v797, %v1982
        %v2000 = vmul.f32 %v798, %v1982
        %v2001 = vmul.f32 %v799, %v1982
        %v2002 = vmul.f32 %v800, %v1982
        %v2003 = vmul.f32 %v801, %v1982
        %v2004 = vmul.f32 %v802, %v1982
        %v2005 = vmul.f32 %v803, %v1982
        %v2006 = vmul.f32 %v804, %v1982
        %v2007 = vmul.f32 %v805, %v1982
        %v2008 = vmul.f32 %v806, %v1982
        %v2009 = vmul.f32 %v807, %v1982
        %v2010 = vmul.f32 %v808, %v1982
        %v2011 = vmul.f32 %v809, %v1982
        %v2012 = vmul.f32 %v810, %v1982
        %v2013 = vmul.f32 %v811, %v1982
        %v2014 = vmul.f32 %v812, %v1982
        %v2015 = vmul.f32 %v813, %v1982
        %v2016 = vmul.f32 %v814, %v1982
        %v2017 = vmul.f32 %v815, %v1982
        %v2018 = vmul.f32 %v816, %v1982
        %v2019 = vmul.f32 %v817, %v1982
        %v2020 = vmul.f32 %v818, %v1982
        %v2021 = vmul.f32 %v819, %v1982
        %v2022 = vmul.f32 %v820, %v1982
        %v2023 = vmul.f32 %v821, %v1982
        %v2024 = vmul.f32 %v822, %v1982
        %v2025 = vmul.f32 %v823, %v1982
        %v2026 = vmul.f32 %v824, %v1982
        %v2027 = vmul.f32 %v825, %v1982
        %v2028 = vmul.f32 %v826, %v1982
        %v2029 = vmul.f32 %v827, %v1982
        %v2030 = vmul.f32 %v828, %v1982
        %v2079 = vrot.slane %v1983, 1
        %v2080 = vrot.slane %v1984, 1
        %v2081 = vsel %vm965, %v2079, %v2080
        %v2082 = vrot.slane %v1985, 1
        %v2083 = vsel %vm965, %v2080, %v2082
        %v2084 = vrot.slane %v1986, 1
        %v2085 = vrot.slane %v1987, 1
        %v2086 = vsel %vm965, %v2084, %v2085
        %v2087 = vrot.slane %v1988, 1
        %v2088 = vsel %vm965, %v2085, %v2087
        %v2089 = vrot.slane %v1989, 1
        %v2090 = vrot.slane %v1990, 1
        %v2091 = vsel %vm965, %v2089, %v2090
        %v2092 = vrot.slane %v1991, 1
        %v2093 = vsel %vm965, %v2090, %v2092
        %v2094 = vrot.slane %v1992, 1
        %v2095 = vrot.slane %v1993, 1
        %v2096 = vsel %vm965, %v2094, %v2095
        %v2097 = vrot.slane %v1994, 1
        %v2098 = vsel %vm965, %v2095, %v2097
        %v2099 = vrot.slane %v1995, 1
        %v2100 = vrot.slane %v1996, 1
        %v2101 = vsel %vm965, %v2099, %v2100
        %v2102 = vrot.slane %v1997, 1
        %v2103 = vsel %vm965, %v2100, %v2102
        %v2104 = vrot.slane %v1998, 1
        %v2105 = vrot.slane %v1999, 1
        %v2106 = vsel %vm965, %v2104, %v2105
        %v2107 = vrot.slane %v2000, 1
        %v2108 = vsel %vm965, %v2105, %v2107
        %v2109 = vrot.slane %v2001, 1
        %v2110 = vrot.slane %v2002, 1
        %v2111 = vsel %vm965, %v2109, %v2110
        %v2112 = vrot.slane %v2003, 1
        %v2113 = vsel %vm965, %v2110, %v2112
        %v2114 = vrot.slane %v2004, 1
        %v2115 = vrot.slane %v2005, 1
        %v2116 = vsel %vm965, %v2114, %v2115
        %v2117 = vrot.slane %v2006, 1
        %v2118 = vsel %vm965, %v2115, %v2117
        %v2119 = vrot.slane %v2007, 1
        %v2120 = vrot.slane %v2008, 1
        %v2121 = vsel %vm965, %v2119, %v2120
        %v2122 = vrot.slane %v2009, 1
        %v2123 = vsel %vm965, %v2120, %v2122
        %v2124 = vrot.slane %v2010, 1
        %v2125 = vrot.slane %v2011, 1
        %v2126 = vsel %vm965, %v2124, %v2125
        %v2127 = vrot.slane %v2012, 1
        %v2128 = vsel %vm965, %v2125, %v2127
        %v2129 = vrot.slane %v2013, 1
        %v2130 = vrot.slane %v2014, 1
        %v2131 = vsel %vm965, %v2129, %v2130
        %v2132 = vrot.slane %v2015, 1
        %v2133 = vsel %vm965, %v2130, %v2132
        %v2134 = vrot.slane %v2016, 1
        %v2135 = vrot.slane %v2017, 1
        %v2136 = vsel %vm965, %v2134, %v2135
        %v2137 = vrot.slane %v2018, 1
        %v2138 = vsel %vm965, %v2135, %v2137
        %v2139 = vrot.slane %v2019, 1
        %v2140 = vrot.slane %v2020, 1
        %v2141 = vsel %vm965, %v2139, %v2140
        %v2142 = vrot.slane %v2021, 1
        %v2143 = vsel %vm965, %v2140, %v2142
        %v2144 = vrot.slane %v2022, 1
        %v2145 = vrot.slane %v2023, 1
        %v2146 = vsel %vm965, %v2144, %v2145
        %v2147 = vrot.slane %v2024, 1
        %v2148 = vsel %vm965, %v2145, %v2147
        %v2149 = vrot.slane %v2025, 1
        %v2150 = vrot.slane %v2026, 1
        %v2151 = vsel %vm965, %v2149, %v2150
        %v2152 = vrot.slane %v2027, 1
        %v2153 = vsel %vm965, %v2150, %v2152
        %v2154 = vrot.slane %v2028, 1
        %v2155 = vrot.slane %v2029, 1
        %v2156 = vsel %vm965, %v2154, %v2155
        %v2157 = vrot.slane %v2030, 1
        %v2158 = vsel %vm965, %v2155, %v2157
        %v2191 = vadd.f32 %v1947, %v2081
        %v2192 = vadd.f32 %v1948, %v2083
        %v2193 = vadd.f32 %v1949, %v2086
        %v2194 = vadd.f32 %v1950, %v2088
        %v2195 = vadd.f32 %v1951, %v2091
        %v2196 = vadd.f32 %v1952, %v2093
        %v2197 = vadd.f32 %v1953, %v2096
        %v2198 = vadd.f32 %v1954, %v2098
        %v2199 = vadd.f32 %v1955, %v2101
        %v2200 = vadd.f32 %v1956, %v2103
        %v2201 = vadd.f32 %v1957, %v2106
        %v2202 = vadd.f32 %v1958, %v2108
        %v2203 = vadd.f32 %v1959, %v2111
        %v2204 = vadd.f32 %v1960, %v2113
        %v2205 = vadd.f32 %v1961, %v2116
        %v2206 = vadd.f32 %v1962, %v2118
        %v2207 = vadd.f32 %v1963, %v2121
        %v2208 = vadd.f32 %v1964, %v2123
        %v2209 = vadd.f32 %v1965, %v2126
        %v2210 = vadd.f32 %v1966, %v2128
        %v2211 = vadd.f32 %v1967, %v2131
        %v2212 = vadd.f32 %v1968, %v2133
        %v2213 = vadd.f32 %v1969, %v2136
        %v2214 = vadd.f32 %v1970, %v2138
        %v2215 = vadd.f32 %v1971, %v2141
        %v2216 = vadd.f32 %v1972, %v2143
        %v2217 = vadd.f32 %v1973, %v2146
        %v2218 = vadd.f32 %v1974, %v2148
        %v2219 = vadd.f32 %v1975, %v2151
        %v2220 = vadd.f32 %v1976, %v2153
        %v2221 = vadd.f32 %v1977, %v2156
        %v2222 = vadd.f32 %v1978, %v2158
        %v2223 = vlaneseq
        %v2224 = vshrl.u32 %v2223, 7
        %v2225 = vsub.s32 0, %v2224
        %v2226 = vrot.slane %v695, %v2225
        %v2227 = vmul.f32 %v781, %v2226
        %v2228 = vmul.f32 %v782, %v2226
        %v2229 = vmul.f32 %v783, %v2226
        %v2230 = vmul.f32 %v784, %v2226
        %v2231 = vmul.f32 %v785, %v2226
        %v2232 = vmul.f32 %v786, %v2226
        %v2233 = vmul.f32 %v787, %v2226
        %v2234 = vmul.f32 %v788, %v2226
        %v2235 = vmul.f32 %v789, %v2226
        %v2236 = vmul.f32 %v790, %v2226
        %v2237 = vmul.f32 %v791, %v2226
        %v2238 = vmul.f32 %v792, %v2226
        %v2239 = vmul.f32 %v793, %v2226
        %v2240 = vmul.f32 %v794, %v2226
        %v2241 = vmul.f32 %v795, %v2226
        %v2242 = vmul.f32 %v796, %v2226
        %v2243 = vmul.f32 %v797, %v2226
        %v2244 = vmul.f32 %v798, %v2226
        %v2245 = vmul.f32 %v799, %v2226
        %v2246 = vmul.f32 %v800, %v2226
        %v2247 = vmul.f32 %v801, %v2226
        %v2248 = vmul.f32 %v802, %v2226
        %v2249 = vmul.f32 %v803, %v2226
        %v2250 = vmul.f32 %v804, %v2226
        %v2251 = vmul.f32 %v805, %v2226
        %v2252 = vmul.f32 %v806, %v2226
        %v2253 = vmul.f32 %v807, %v2226
        %v2254 = vmul.f32 %v808, %v2226
        %v2255 = vmul.f32 %v809, %v2226
        %v2256 = vmul.f32 %v810, %v2226
        %v2257 = vmul.f32 %v811, %v2226
        %v2258 = vmul.f32 %v812, %v2226
        %v2259 = vmul.f32 %v813, %v2226
        %v2260 = vmul.f32 %v814, %v2226
        %v2261 = vmul.f32 %v815, %v2226
        %v2262 = vmul.f32 %v816, %v2226
        %v2263 = vmul.f32 %v817, %v2226
        %v2264 = vmul.f32 %v818, %v2226
        %v2265 = vmul.f32 %v819, %v2226
        %v2266 = vmul.f32 %v820, %v2226
        %v2267 = vmul.f32 %v821, %v2226
        %v2268 = vmul.f32 %v822, %v2226
        %v2269 = vmul.f32 %v823, %v2226
        %v2270 = vmul.f32 %v824, %v2226
        %v2271 = vmul.f32 %v825, %v2226
        %v2272 = vmul.f32 %v826, %v2226
        %v2273 = vmul.f32 %v827, %v2226
        %v2274 = vmul.f32 %v828, %v2226
        %v2323 = vrot.slane %v2227, 2
        %v2324 = vrot.slane %v2228, 2
        %v2325 = vsel %vm1210, %v2323, %v2324
        %v2326 = vrot.slane %v2229, 2
        %v2327 = vsel %vm1210, %v2324, %v2326
        %v2328 = vrot.slane %v2230, 2
        %v2329 = vrot.slane %v2231, 2
        %v2330 = vsel %vm1210, %v2328, %v2329
        %v2331 = vrot.slane %v2232, 2
        %v2332 = vsel %vm1210, %v2329, %v2331
        %v2333 = vrot.slane %v2233, 2
        %v2334 = vrot.slane %v2234, 2
        %v2335 = vsel %vm1210, %v2333, %v2334
        %v2336 = vrot.slane %v2235, 2
        %v2337 = vsel %vm1210, %v2334, %v2336
        %v2338 = vrot.slane %v2236, 2
        %v2339 = vrot.slane %v2237, 2
        %v2340 = vsel %vm1210, %v2338, %v2339
        %v2341 = vrot.slane %v2238, 2
        %v2342 = vsel %vm1210, %v2339, %v2341
        %v2343 = vrot.slane %v2239, 2
        %v2344 = vrot.slane %v2240, 2
        %v2345 = vsel %vm1210, %v2343, %v2344
        %v2346 = vrot.slane %v2241, 2
        %v2347 = vsel %vm1210, %v2344, %v2346
        %v2348 = vrot.slane %v2242, 2
        %v2349 = vrot.slane %v2243, 2
        %v2350 = vsel %vm1210, %v2348, %v2349
        %v2351 = vrot.slane %v2244, 2
        %v2352 = vsel %vm1210, %v2349, %v2351
        %v2353 = vrot.slane %v2245, 2
        %v2354 = vrot.slane %v2246, 2
        %v2355 = vsel %vm1210, %v2353, %v2354
        %v2356 = vrot.slane %v2247, 2
        %v2357 = vsel %vm1210, %v2354, %v2356
        %v2358 = vrot.slane %v2248, 2
        %v2359 = vrot.slane %v2249, 2
        %v2360 = vsel %vm1210, %v2358, %v2359
        %v2361 = vrot.slane %v2250, 2
        %v2362 = vsel %vm1210, %v2359, %v2361
        %v2363 = vrot.slane %v2251, 2
        %v2364 = vrot.slane %v2252, 2
        %v2365 = vsel %vm1210, %v2363, %v2364
        %v2366 = vrot.slane %v2253, 2
        %v2367 = vsel %vm1210, %v2364, %v2366
        %v2368 = vrot.slane %v2254, 2
        %v2369 = vrot.slane %v2255, 2
        %v2370 = vsel %vm1210, %v2368, %v2369
        %v2371 = vrot.slane %v2256, 2
        %v2372 = vsel %vm1210, %v2369, %v2371
        %v2373 = vrot.slane %v2257, 2
        %v2374 = vrot.slane %v2258, 2
        %v2375 = vsel %vm1210, %v2373, %v2374
        %v2376 = vrot.slane %v2259, 2
        %v2377 = vsel %vm1210, %v2374, %v2376
        %v2378 = vrot.slane %v2260, 2
        %v2379 = vrot.slane %v2261, 2
        %v2380 = vsel %vm1210, %v2378, %v2379
        %v2381 = vrot.slane %v2262, 2
        %v2382 = vsel %vm1210, %v2379, %v2381
        %v2383 = vrot.slane %v2263, 2
        %v2384 = vrot.slane %v2264, 2
        %v2385 = vsel %vm1210, %v2383, %v2384
        %v2386 = vrot.slane %v2265, 2
        %v2387 = vsel %vm1210, %v2384, %v2386
        %v2388 = vrot.slane %v2266, 2
        %v2389 = vrot.slane %v2267, 2
        %v2390 = vsel %vm1210, %v2388, %v2389
        %v2391 = vrot.slane %v2268, 2
        %v2392 = vsel %vm1210, %v2389, %v2391
        %v2393 = vrot.slane %v2269, 2
        %v2394 = vrot.slane %v2270, 2
        %v2395 = vsel %vm1210, %v2393, %v2394
        %v2396 = vrot.slane %v2271, 2
        %v2397 = vsel %vm1210, %v2394, %v2396
        %v2398 = vrot.slane %v2272, 2
        %v2399 = vrot.slane %v2273, 2
        %v2400 = vsel %vm1210, %v2398, %v2399
        %v2401 = vrot.slane %v2274, 2
        %v2402 = vsel %vm1210, %v2399, %v2401
        %v2435 = vadd.f32 %v2191, %v2325
        %v2436 = vadd.f32 %v2192, %v2327
        %v2437 = vadd.f32 %v2193, %v2330
        %v2438 = vadd.f32 %v2194, %v2332
        %v2439 = vadd.f32 %v2195, %v2335
        %v2440 = vadd.f32 %v2196, %v2337
        %v2441 = vadd.f32 %v2197, %v2340
        %v2442 = vadd.f32 %v2198, %v2342
        %v2443 = vadd.f32 %v2199, %v2345
        %v2444 = vadd.f32 %v2200, %v2347
        %v2445 = vadd.f32 %v2201, %v2350
        %v2446 = vadd.f32 %v2202, %v2352
        %v2447 = vadd.f32 %v2203, %v2355
        %v2448 = vadd.f32 %v2204, %v2357
        %v2449 = vadd.f32 %v2205, %v2360
        %v2450 = vadd.f32 %v2206, %v2362
        %v2451 = vadd.f32 %v2207, %v2365
        %v2452 = vadd.f32 %v2208, %v2367
        %v2453 = vadd.f32 %v2209, %v2370
        %v2454 = vadd.f32 %v2210, %v2372
        %v2455 = vadd.f32 %v2211, %v2375
        %v2456 = vadd.f32 %v2212, %v2377
        %v2457 = vadd.f32 %v2213, %v2380
        %v2458 = vadd.f32 %v2214, %v2382
        %v2459 = vadd.f32 %v2215, %v2385
        %v2460 = vadd.f32 %v2216, %v2387
        %v2461 = vadd.f32 %v2217, %v2390
        %v2462 = vadd.f32 %v2218, %v2392
        %v2463 = vadd.f32 %v2219, %v2395
        %v2464 = vadd.f32 %v2220, %v2397
        %v2465 = vadd.f32 %v2221, %v2400
        %v2466 = vadd.f32 %v2222, %v2402
        %v2467 = vld [vmem:[%s4] sm:$0x1]
        %v2469 = vlaneseq
        %v2470 = vshrl.u32 %v2469, 7
        %v2471 = vsub.s32 0, %v2470
        %v2472 = vrot.slane %v2467, %v2471
        %v2474 = vadd.f32 %v2435, %v2472
        %v2475 = vadd.f32 %v2436, %v2472
        %v2476 = vadd.f32 %v2437, %v2472
        %v2477 = vadd.f32 %v2438, %v2472
        %v2478 = vadd.f32 %v2439, %v2472
        %v2479 = vadd.f32 %v2440, %v2472
        %v2480 = vadd.f32 %v2441, %v2472
        %v2481 = vadd.f32 %v2442, %v2472
        %v2482 = vadd.f32 %v2443, %v2472
        %v2483 = vadd.f32 %v2444, %v2472
        %v2484 = vadd.f32 %v2445, %v2472
        %v2485 = vadd.f32 %v2446, %v2472
        %v2486 = vadd.f32 %v2447, %v2472
        %v2487 = vadd.f32 %v2448, %v2472
        %v2488 = vadd.f32 %v2449, %v2472
        %v2489 = vadd.f32 %v2450, %v2472
        %v2490 = vadd.f32 %v2451, %v2472
        %v2491 = vadd.f32 %v2452, %v2472
        %v2492 = vadd.f32 %v2453, %v2472
        %v2493 = vadd.f32 %v2454, %v2472
        %v2494 = vadd.f32 %v2455, %v2472
        %v2495 = vadd.f32 %v2456, %v2472
        %v2496 = vadd.f32 %v2457, %v2472
        %v2497 = vadd.f32 %v2458, %v2472
        %v2498 = vadd.f32 %v2459, %v2472
        %v2499 = vadd.f32 %v2460, %v2472
        %v2500 = vadd.f32 %v2461, %v2472
        %v2501 = vadd.f32 %v2462, %v2472
        %v2502 = vadd.f32 %v2463, %v2472
        %v2503 = vadd.f32 %v2464, %v2472
        %v2504 = vadd.f32 %v2465, %v2472
        %v2505 = vadd.f32 %v2466, %v2472
        %v2506 = vmax.f32 %v2474, 0.0
        %v2507 = vmax.f32 %v2475, 0.0
        %v2508 = vmax.f32 %v2476, 0.0
        %v2509 = vmax.f32 %v2477, 0.0
        %v2510 = vmax.f32 %v2478, 0.0
        %v2511 = vmax.f32 %v2479, 0.0
        %v2512 = vmax.f32 %v2480, 0.0
        %v2513 = vmax.f32 %v2481, 0.0
        %v2514 = vmax.f32 %v2482, 0.0
        %v2515 = vmax.f32 %v2483, 0.0
        %v2516 = vmax.f32 %v2484, 0.0
        %v2517 = vmax.f32 %v2485, 0.0
        %v2518 = vmax.f32 %v2486, 0.0
        %v2519 = vmax.f32 %v2487, 0.0
        %v2520 = vmax.f32 %v2488, 0.0
        %v2521 = vmax.f32 %v2489, 0.0
        %v2522 = vmax.f32 %v2490, 0.0
        %v2523 = vmax.f32 %v2491, 0.0
        %v2524 = vmax.f32 %v2492, 0.0
        %v2525 = vmax.f32 %v2493, 0.0
        %v2526 = vmax.f32 %v2494, 0.0
        %v2527 = vmax.f32 %v2495, 0.0
        %v2528 = vmax.f32 %v2496, 0.0
        %v2529 = vmax.f32 %v2497, 0.0
        %v2530 = vmax.f32 %v2498, 0.0
        %v2531 = vmax.f32 %v2499, 0.0
        %v2532 = vmax.f32 %v2500, 0.0
        %v2533 = vmax.f32 %v2501, 0.0
        %v2534 = vmax.f32 %v2502, 0.0
        %v2535 = vmax.f32 %v2503, 0.0
        %v2536 = vmax.f32 %v2504, 0.0
        %v2537 = vmax.f32 %v2505, 0.0
        %v2538 = vld [vmem:[%s5] sm:$0xf]
        %v2539 = vld [vmem:[%s6] sm:$0x1]
        %v2541 = vlaneseq
        %v2542 = vshrl.u32 %v2541, 7
        %v2543 = vsub.s32 0, %v2542
        %v2544 = vrot.slane %v2539, %v2543
        %v2547 = vsel %vm696, %v2506, 0
        %v2550 = vsel %vm696, %v2507, 0
        %v2553 = vsel %vm696, %v2508, 0
        %v2556 = vsel %vm696, %v2509, 0
        %v2559 = vsel %vm696, %v2510, 0
        %v2562 = vsel %vm696, %v2511, 0
        %v2565 = vsel %vm696, %v2512, 0
        %v2568 = vsel %vm696, %v2513, 0
        %v2571 = vsel %vm696, %v2514, 0
        %v2574 = vsel %vm696, %v2515, 0
        %v2577 = vsel %vm696, %v2516, 0
        %v2580 = vsel %vm696, %v2517, 0
        %v2583 = vsel %vm696, %v2518, 0
        %v2586 = vsel %vm696, %v2519, 0
        %v2589 = vsel %vm696, %v2520, 0
        %v2592 = vsel %vm696, %v2521, 0
        %v2595 = vsel %vm696, %v2522, 0
        %v2598 = vsel %vm696, %v2523, 0
        %v2601 = vsel %vm696, %v2524, 0
        %v2604 = vsel %vm696, %v2525, 0
        %v2607 = vsel %vm696, %v2526, 0
        %v2610 = vsel %vm696, %v2527, 0
        %v2613 = vsel %vm696, %v2528, 0
        %v2616 = vsel %vm696, %v2529, 0
        %v2619 = vsel %vm696, %v2530, 0
        %v2622 = vsel %vm696, %v2531, 0
        %v2625 = vsel %vm696, %v2532, 0
        %v2628 = vsel %vm696, %v2533, 0
        %v2631 = vsel %vm696, %v2534, 0
        %v2634 = vsel %vm696, %v2535, 0
        %v2637 = vsel %vm696, %v2536, 0
        %v2640 = vsel %vm696, %v2537, 0
        %vm2642 = vcmask 1043456
        %v2644 = vsel %vm2642, %v2538, 0
        %2646 = vmatprep.subr.mxu0 0.0
        %2647 = vmatpush1.msra.mxu0 %v2644
        %2648 = vmatprep.subr.mxu0 0.0
        %2649 = vmatpush1.msra.mxu0 0.0
        %2650 = vmatprep.subr.mxu0 0.0
        %2651 = vmatpush1.msra.mxu0 0.0
        %2652 = vmatprep.subr.mxu0 0.0
        %2653 = vmatpush1.msra.mxu0 0.0
        %2654 = vmatprep.subr.mxu0 0.0
        %2655 = vmatpush1.msra.mxu0 0.0
        %2656 = vmatprep.subr.mxu0 0.0
        %2657 = vmatpush1.msra.mxu0 0.0
        %2658 = vmatprep.subr.mxu0 0.0
        %2659 = vmatpush1.msra.mxu0 0.0
        %2660 = vmatprep.subr.mxu0 0.0
        %2661 = vmatpush1.msra.mxu0 0.0
        %2662 = vmatprep.subr.mxu0 0.0
        %2663 = vmatpush1.msra.mxu0 0.0
        %2664 = vmatprep.subr.mxu0 0.0
        %2665 = vmatpush1.msra.mxu0 0.0
        %2666 = vmatprep.subr.mxu0 0.0
        %2667 = vmatpush1.msra.mxu0 0.0
        %2668 = vmatprep.subr.mxu0 0.0
        %2669 = vmatpush1.msra.mxu0 0.0
        %2670 = vmatprep.subr.mxu0 0.0
        %2671 = vmatpush1.msra.mxu0 0.0
        %2672 = vmatprep.subr.mxu0 0.0
        %2673 = vmatpush1.msra.mxu0 0.0
        %2674 = vmatprep.subr.mxu0 0.0
        %2675 = vmatpush1.msra.mxu0 0.0
        %2676 = vmatprep.subr.mxu0 0.0
        %2677 = vmatpush1.msra.mxu0 0.0
        %2678 = vmatprep.subr.mxu0 0.0
        %2679 = vmatpush1.msra.mxu0 0.0
        %2680 = vmatprep.subr.mxu0 0.0
        %2681 = vmatpush1.msra.mxu0 0.0
        %2682 = vmatprep.subr.mxu0 0.0
        %2683 = vmatpush1.msra.mxu0 0.0
        %2684 = vmatprep.subr.mxu0 0.0
        %2685 = vmatpush1.msra.mxu0 0.0
        %2686 = vmatprep.subr.mxu0 0.0
        %2687 = vmatpush1.msra.mxu0 0.0
        %2688 = vmatprep.subr.mxu0 0.0
        %2689 = vmatpush1.msra.mxu0 0.0
        %2690 = vmatprep.subr.mxu0 0.0
        %2691 = vmatpush1.msra.mxu0 0.0
        %2692 = vmatprep.subr.mxu0 0.0
        %2693 = vmatpush1.msra.mxu0 0.0
        %2694 = vmatprep.subr.mxu0 0.0
        %2695 = vmatpush1.msra.mxu0 0.0
        %2696 = vmatprep.subr.mxu0 0.0
        %2697 = vmatpush1.msra.mxu0 0.0
        %2698 = vmatprep.subr.mxu0 0.0
        %2699 = vmatpush1.msra.mxu0 0.0
        %2700 = vmatprep.subr.mxu0 0.0
        %2701 = vmatpush1.msra.mxu0 0.0
        %2702 = vmatprep.subr.mxu0 0.0
        %2703 = vmatpush1.msra.mxu0 0.0
        %2704 = vmatprep.subr.mxu0 0.0
        %2705 = vmatpush1.msra.mxu0 0.0
        %2706 = vmatprep.subr.mxu0 0.0
        %2707 = vmatpush1.msra.mxu0 0.0
        %2708 = vmatprep.subr.mxu0 0.0
        %2709 = vmatpush1.msra.mxu0 0.0
        %2710 = vmatprep.mubr.f32.mxu0 0.0
        %2711 = vmatmul.mubr.f32.gmra.mrb[0].mxu0 %v2547
        %v2712 = vpop.f32.mrb[0].mxu0
        %v2713 = vadd.f32 %v2544, %v2712
        %v2714 = vpop.f32.mrb[0].mxu0
        %2715 = vmatprep.mubr.f32.mxu0 0.0
        %2716 = vmatmul.mubr.f32.gmra.mrb[0].mxu0 %v2550
        %v2717 = vpop.f32.mrb[0].mxu0
        %v2718 = vadd.f32 %v2544, %v2717
        %v2719 = vpop.f32.mrb[0].mxu0
        %2720 = vmatprep.mubr.f32.mxu0 0.0
        %2721 = vmatmul.mubr.f32.gmra.mrb[0].mxu0 %v2553
        %v2722 = vpop.f32.mrb[0].mxu0
        %v2723 = vadd.f32 %v2544, %v2722
        %v2724 = vpop.f32.mrb[0].mxu0
        %2725 = vmatprep.mubr.f32.mxu0 0.0
        %2726 = vmatmul.mubr.f32.gmra.mrb[0].mxu0 %v2556
        %v2727 = vpop.f32.mrb[0].mxu0
        %v2728 = vadd.f32 %v2544, %v2727
        %v2729 = vpop.f32.mrb[0].mxu0
        %2730 = vmatprep.mubr.f32.mxu0 0.0
        %2731 = vmatmul.mubr.f32.gmra.mrb[0].mxu0 %v2559
        %v2732 = vpop.f32.mrb[0].mxu0
        %v2733 = vadd.f32 %v2544, %v2732
        %v2734 = vpop.f32.mrb[0].mxu0
        %2735 = vmatprep.mubr.f32.mxu0 0.0
        %2736 = vmatmul.mubr.f32.gmra.mrb[0].mxu0 %v2562
        %v2737 = vpop.f32.mrb[0].mxu0
        %v2738 = vadd.f32 %v2544, %v2737
        %v2739 = vpop.f32.mrb[0].mxu0
        %2740 = vmatprep.mubr.f32.mxu0 0.0
        %2741 = vmatmul.mubr.f32.gmra.mrb[0].mxu0 %v2565
        %v2742 = vpop.f32.mrb[0].mxu0
        %v2743 = vadd.f32 %v2544, %v2742
        %v2744 = vpop.f32.mrb[0].mxu0
        %2745 = vmatprep.mubr.f32.mxu0 0.0
        %2746 = vmatmul.mubr.f32.gmra.mrb[0].mxu0 %v2568
        %v2747 = vpop.f32.mrb[0].mxu0
        %v2748 = vadd.f32 %v2544, %v2747
        %v2749 = vpop.f32.mrb[0].mxu0
        %2750 = vmatprep.mubr.f32.mxu0 0.0
        %2751 = vmatmul.mubr.f32.gmra.mrb[0].mxu0 %v2571
        %v2752 = vpop.f32.mrb[0].mxu0
        %v2753 = vadd.f32 %v2544, %v2752
        %v2754 = vpop.f32.mrb[0].mxu0
        %2755 = vmatprep.mubr.f32.mxu0 0.0
        %2756 = vmatmul.mubr.f32.gmra.mrb[0].mxu0 %v2574
        %v2757 = vpop.f32.mrb[0].mxu0
        %v2758 = vadd.f32 %v2544, %v2757
        %v2759 = vpop.f32.mrb[0].mxu0
        %2760 = vmatprep.mubr.f32.mxu0 0.0
        %2761 = vmatmul.mubr.f32.gmra.mrb[0].mxu0 %v2577
        %v2762 = vpop.f32.mrb[0].mxu0
        %v2763 = vadd.f32 %v2544, %v2762
        %v2764 = vpop.f32.mrb[0].mxu0
        %2765 = vmatprep.mubr.f32.mxu0 0.0
        %2766 = vmatmul.mubr.f32.gmra.mrb[0].mxu0 %v2580
        %v2767 = vpop.f32.mrb[0].mxu0
        %v2768 = vadd.f32 %v2544, %v2767
        %v2769 = vpop.f32.mrb[0].mxu0
        %2770 = vmatprep.mubr.f32.mxu0 0.0
        %2771 = vmatmul.mubr.f32.gmra.mrb[0].mxu0 %v2583
        %v2772 = vpop.f32.mrb[0].mxu0
        %v2773 = vadd.f32 %v2544, %v2772
        %v2774 = vpop.f32.mrb[0].mxu0
        %2775 = vmatprep.mubr.f32.mxu0 0.0
        %2776 = vmatmul.mubr.f32.gmra.mrb[0].mxu0 %v2586
        %v2777 = vpop.f32.mrb[0].mxu0
        %v2778 = vadd.f32 %v2544, %v2777
        %v2779 = vpop.f32.mrb[0].mxu0
        %2780 = vmatprep.mubr.f32.mxu0 0.0
        %2781 = vmatmul.mubr.f32.gmra.mrb[0].mxu0 %v2589
        %v2782 = vpop.f32.mrb[0].mxu0
        %v2783 = vadd.f32 %v2544, %v2782
        %v2784 = vpop.f32.mrb[0].mxu0
        %2785 = vmatprep.mubr.f32.mxu0 0.0
        %2786 = vmatmul.mubr.f32.gmra.mrb[0].mxu0 %v2592
        %v2787 = vpop.f32.mrb[0].mxu0
        %v2788 = vadd.f32 %v2544, %v2787
        %v2789 = vpop.f32.mrb[0].mxu0
        %2790 = vmatprep.mubr.f32.mxu0 0.0
        %2791 = vmatmul.mubr.f32.gmra.mrb[0].mxu0 %v2595
        %v2792 = vpop.f32.mrb[0].mxu0
        %v2793 = vadd.f32 %v2544, %v2792
        %v2794 = vpop.f32.mrb[0].mxu0
        %2795 = vmatprep.mubr.f32.mxu0 0.0
        %2796 = vmatmul.mubr.f32.gmra.mrb[0].mxu0 %v2598
        %v2797 = vpop.f32.mrb[0].mxu0
        %v2798 = vadd.f32 %v2544, %v2797
        %v2799 = vpop.f32.mrb[0].mxu0
        %2800 = vmatprep.mubr.f32.mxu0 0.0
        %2801 = vmatmul.mubr.f32.gmra.mrb[0].mxu0 %v2601
        %v2802 = vpop.f32.mrb[0].mxu0
        %v2803 = vadd.f32 %v2544, %v2802
        %v2804 = vpop.f32.mrb[0].mxu0
        %2805 = vmatprep.mubr.f32.mxu0 0.0
        %2806 = vmatmul.mubr.f32.gmra.mrb[0].mxu0 %v2604
        %v2807 = vpop.f32.mrb[0].mxu0
        %v2808 = vadd.f32 %v2544, %v2807
        %v2809 = vpop.f32.mrb[0].mxu0
        %2810 = vmatprep.mubr.f32.mxu0 0.0
        %2811 = vmatmul.mubr.f32.gmra.mrb[0].mxu0 %v2607
        %v2812 = vpop.f32.mrb[0].mxu0
        %v2813 = vadd.f32 %v2544, %v2812
        %v2814 = vpop.f32.mrb[0].mxu0
        %2815 = vmatprep.mubr.f32.mxu0 0.0
        %2816 = vmatmul.mubr.f32.gmra.mrb[0].mxu0 %v2610
        %v2817 = vpop.f32.mrb[0].mxu0
        %v2818 = vadd.f32 %v2544, %v2817
        %v2819 = vpop.f32.mrb[0].mxu0
        %2820 = vmatprep.mubr.f32.mxu0 0.0
        %2821 = vmatmul.mubr.f32.gmra.mrb[0].mxu0 %v2613
        %v2822 = vpop.f32.mrb[0].mxu0
        %v2823 = vadd.f32 %v2544, %v2822
        %v2824 = vpop.f32.mrb[0].mxu0
        %2825 = vmatprep.mubr.f32.mxu0 0.0
        %2826 = vmatmul.mubr.f32.gmra.mrb[0].mxu0 %v2616
        %v2827 = vpop.f32.mrb[0].mxu0
        %v2828 = vadd.f32 %v2544, %v2827
        %v2829 = vpop.f32.mrb[0].mxu0
        %2830 = vmatprep.mubr.f32.mxu0 0.0
        %2831 = vmatmul.mubr.f32.gmra.mrb[0].mxu0 %v2619
        %v2832 = vpop.f32.mrb[0].mxu0
        %v2833 = vadd.f32 %v2544, %v2832
        %v2834 = vpop.f32.mrb[0].mxu0
        %2835 = vmatprep.mubr.f32.mxu0 0.0
        %2836 = vmatmul.mubr.f32.gmra.mrb[0].mxu0 %v2622
        %v2837 = vpop.f32.mrb[0].mxu0
        %v2838 = vadd.f32 %v2544, %v2837
        %v2839 = vpop.f32.mrb[0].mxu0
        %2840 = vmatprep.mubr.f32.mxu0 0.0
        %2841 = vmatmul.mubr.f32.gmra.mrb[0].mxu0 %v2625
        %v2842 = vpop.f32.mrb[0].mxu0
        %v2843 = vadd.f32 %v2544, %v2842
        %v2844 = vpop.f32.mrb[0].mxu0
        %2845 = vmatprep.mubr.f32.mxu0 0.0
        %2846 = vmatmul.mubr.f32.gmra.mrb[0].mxu0 %v2628
        %v2847 = vpop.f32.mrb[0].mxu0
        %v2848 = vadd.f32 %v2544, %v2847
        %v2849 = vpop.f32.mrb[0].mxu0
        %2850 = vmatprep.mubr.f32.mxu0 0.0
        %2851 = vmatmul.mubr.f32.gmra.mrb[0].mxu0 %v2631
        %v2852 = vpop.f32.mrb[0].mxu0
        %v2853 = vadd.f32 %v2544, %v2852
        %v2854 = vpop.f32.mrb[0].mxu0
        %2855 = vmatprep.mubr.f32.mxu0 0.0
        %2856 = vmatmul.mubr.f32.gmra.mrb[0].mxu0 %v2634
        %v2857 = vpop.f32.mrb[0].mxu0
        %v2858 = vadd.f32 %v2544, %v2857
        %v2859 = vpop.f32.mrb[0].mxu0
        %2860 = vmatprep.mubr.f32.mxu0 0.0
        %2861 = vmatmul.mubr.f32.gmra.mrb[0].mxu0 %v2637
        %v2862 = vpop.f32.mrb[0].mxu0
        %v2863 = vadd.f32 %v2544, %v2862
        %v2864 = vpop.f32.mrb[0].mxu0
        %2865 = vmatprep.mubr.f32.mxu0 0.0
        %2866 = vmatmul.mubr.f32.gmra.mrb[0].mxu0 %v2640
        %v2867 = vpop.f32.mrb[0].mxu0
        %v2868 = vadd.f32 %v2544, %v2867
        %v2869 = vpop.f32.mrb[0].mxu0
        %2870 = vdwg.mxu0
        %v2871 = vadd.f32 %v2713, %v299
        %v2872 = vadd.f32 %v2718, %v300
        %v2873 = vadd.f32 %v2723, %v301
        %v2874 = vadd.f32 %v2728, %v302
        %v2875 = vadd.f32 %v2733, %v303
        %v2876 = vadd.f32 %v2738, %v304
        %v2877 = vadd.f32 %v2743, %v305
        %v2878 = vadd.f32 %v2748, %v306
        %v2879 = vadd.f32 %v2753, %v307
        %v2880 = vadd.f32 %v2758, %v308
        %v2881 = vadd.f32 %v2763, %v309
        %v2882 = vadd.f32 %v2768, %v310
        %v2883 = vadd.f32 %v2773, %v311
        %v2884 = vadd.f32 %v2778, %v312
        %v2885 = vadd.f32 %v2783, %v313
        %v2886 = vadd.f32 %v2788, %v314
        %v2887 = vadd.f32 %v2793, %v315
        %v2888 = vadd.f32 %v2798, %v316
        %v2889 = vadd.f32 %v2803, %v317
        %v2890 = vadd.f32 %v2808, %v318
        %v2891 = vadd.f32 %v2813, %v319
        %v2892 = vadd.f32 %v2818, %v320
        %v2893 = vadd.f32 %v2823, %v321
        %v2894 = vadd.f32 %v2828, %v322
        %v2895 = vadd.f32 %v2833, %v323
        %v2896 = vadd.f32 %v2838, %v324
        %v2897 = vadd.f32 %v2843, %v325
        %v2898 = vadd.f32 %v2848, %v326
        %v2899 = vadd.f32 %v2853, %v327
        %v2900 = vadd.f32 %v2858, %v328
        %v2901 = vadd.f32 %v2863, %v329
        %v2902 = vadd.f32 %v2868, %v330
        %v2903 = vmax.f32 %v2871, 0.0
        %v2904 = vmax.f32 %v2872, 0.0
        %v2905 = vmax.f32 %v2873, 0.0
        %v2906 = vmax.f32 %v2874, 0.0
        %v2907 = vmax.f32 %v2875, 0.0
        %v2908 = vmax.f32 %v2876, 0.0
        %v2909 = vmax.f32 %v2877, 0.0
        %v2910 = vmax.f32 %v2878, 0.0
        %v2911 = vmax.f32 %v2879, 0.0
        %v2912 = vmax.f32 %v2880, 0.0
        %v2913 = vmax.f32 %v2881, 0.0
        %v2914 = vmax.f32 %v2882, 0.0
        %v2915 = vmax.f32 %v2883, 0.0
        %v2916 = vmax.f32 %v2884, 0.0
        %v2917 = vmax.f32 %v2885, 0.0
        %v2918 = vmax.f32 %v2886, 0.0
        %v2919 = vmax.f32 %v2887, 0.0
        %v2920 = vmax.f32 %v2888, 0.0
        %v2921 = vmax.f32 %v2889, 0.0
        %v2922 = vmax.f32 %v2890, 0.0
        %v2923 = vmax.f32 %v2891, 0.0
        %v2924 = vmax.f32 %v2892, 0.0
        %v2925 = vmax.f32 %v2893, 0.0
        %v2926 = vmax.f32 %v2894, 0.0
        %v2927 = vmax.f32 %v2895, 0.0
        %v2928 = vmax.f32 %v2896, 0.0
        %v2929 = vmax.f32 %v2897, 0.0
        %v2930 = vmax.f32 %v2898, 0.0
        %v2931 = vmax.f32 %v2899, 0.0
        %v2932 = vmax.f32 %v2900, 0.0
        %v2933 = vmax.f32 %v2901, 0.0
        %v2934 = vmax.f32 %v2902, 0.0
        %2935 = vst.msk [vmem:[%s298] sm:$0xff] %vm340, %v2903
        %2936 = vst.msk [vmem:[%s298 + $0x8] sm:$0xff] %vm340, %v2904
        %2937 = vst.msk [vmem:[%s298 + $0x10] sm:$0xff] %vm340, %v2905
        %2938 = vst.msk [vmem:[%s298 + $0x18] sm:$0xff] %vm340, %v2906
        %2939 = vst.msk [vmem:[%s298 + $0x20] sm:$0xff] %vm340, %v2907
        %2940 = vst.msk [vmem:[%s298 + $0x28] sm:$0xff] %vm340, %v2908
        %2941 = vst.msk [vmem:[%s298 + $0x30] sm:$0xff] %vm340, %v2909
        %2942 = vst.msk [vmem:[%s298 + $0x38] sm:$0xff] %vm340, %v2910
        %2943 = vst.msk [vmem:[%s298 + $0x40] sm:$0xff] %vm340, %v2911
        %2944 = vst.msk [vmem:[%s298 + $0x48] sm:$0xff] %vm340, %v2912
        %2945 = vst.msk [vmem:[%s298 + $0x50] sm:$0xff] %vm340, %v2913
        %2946 = vst.msk [vmem:[%s298 + $0x58] sm:$0xff] %vm340, %v2914
        %2947 = vst.msk [vmem:[%s298 + $0x60] sm:$0xff] %vm340, %v2915
        %2948 = vst.msk [vmem:[%s298 + $0x68] sm:$0xff] %vm340, %v2916
        %2949 = vst.msk [vmem:[%s298 + $0x70] sm:$0xff] %vm340, %v2917
        %2950 = vst.msk [vmem:[%s298 + $0x78] sm:$0xff] %vm340, %v2918
        %2951 = vst.msk [vmem:[%s298 + $0x80] sm:$0xff] %vm340, %v2919
        %2952 = vst.msk [vmem:[%s298 + $0x88] sm:$0xff] %vm340, %v2920
        %2953 = vst.msk [vmem:[%s298 + $0x90] sm:$0xff] %vm340, %v2921
        %2954 = vst.msk [vmem:[%s298 + $0x98] sm:$0xff] %vm340, %v2922
        %2955 = vst.msk [vmem:[%s298 + $0xa0] sm:$0xff] %vm340, %v2923
        %2956 = vst.msk [vmem:[%s298 + $0xa8] sm:$0xff] %vm340, %v2924
        %2957 = vst.msk [vmem:[%s298 + $0xb0] sm:$0xff] %vm340, %v2925
        %2958 = vst.msk [vmem:[%s298 + $0xb8] sm:$0xff] %vm340, %v2926
        %2959 = vst.msk [vmem:[%s298 + $0xc0] sm:$0xff] %vm340, %v2927
        %2960 = vst.msk [vmem:[%s298 + $0xc8] sm:$0xff] %vm340, %v2928
        %2961 = vst.msk [vmem:[%s298 + $0xd0] sm:$0xff] %vm340, %v2929
        %2962 = vst.msk [vmem:[%s298 + $0xd8] sm:$0xff] %vm340, %v2930
        %2963 = vst.msk [vmem:[%s298 + $0xe0] sm:$0xff] %vm340, %v2931
        %2964 = vst.msk [vmem:[%s298 + $0xe8] sm:$0xff] %vm340, %v2932
        %2965 = vst.msk [vmem:[%s298 + $0xf0] sm:$0xff] %vm340, %v2933
        %2966 = vst.msk [vmem:[%s298 + $0xf8] sm:$0xff] %vm340, %v2934
        %p2967 = scmp.lt.s32.totalorder %s21, 1
        %s2968 = scalar_select %p2967, %s21, 1
        %s2969 = smul.addr %s2968, 32
        %s2970 = smul.addr %s2969, 8
        %s2971 = scalar_lea.vmem %s7, %s2970
        // Predicated region
        $region53: #{tpu_custom_call.1} parent=47 // pred_check
          %p2972 = pneg %p191
        $region54: #{tpu_custom_call.1} parent=47 // pred_check_branch
          %2974 = sbr.rel (%p2972) target = $region56
        $region55: #{tpu_custom_call.1} parent=47 // pred_region
          _
        $region56: #{tpu_custom_call.1} parent=47 // pred_fallthru
          _
      $region48: #{tpu_custom_call.1} parent=5 // pred_fallthru
        _
      %p2975 = scmp.le.s32.totalorder 2, %s16
      // Predicated region
      $region57: #{tpu_custom_call.1} parent=5 // pred_check
        %p2976 = pneg %p2975
      $region58: #{tpu_custom_call.1} parent=5 // pred_check_branch
        %2978 = sbr.rel (%p2976) target = $region60
      $region59: #{tpu_custom_call.1} parent=5 // pred_region
        %s2979 = ssub.s32 %s16, 2
        // Predicated region
        $region61: #{tpu_custom_call.1} parent=59 // pred_check
          %p2980 = pneg %p197
        $region62: #{tpu_custom_call.1} parent=59 // pred_check_branch
          %2982 = sbr.rel (%p2980) target = $region64
        $region63: #{tpu_custom_call.1} parent=59 // pred_region
          %p2983 = scmp.lt.s32.totalorder %s22, 1
          %s2984 = scalar_select %p2983, %s22, 1
          %s2985 = smul.addr %s2984, 32
          %s2986 = smul.addr %s2985, 8
          %s2987 = scalar_lea.vmem %s7, %s2986
        $region64: #{tpu_custom_call.1} parent=59 // pred_fallthru
          _
      $region60: #{tpu_custom_call.1} parent=5 // pred_fallthru
        _
    $region6: #{tpu_custom_call.1} parent=1 // loop_footer
      %s20 = sadd.s32 1, %s16
    $region7: #{tpu_custom_call.1} parent=1 // loop_footer_branch
      %15 = sbr.rel target = $region3
    $region8: #{tpu_custom_call.1} parent=1 // loop_exit
      _
    %2988 = vsyncpa [#allocation4], 1
    %s2989 = scalar_lea.sflag [#allocation4], 1
    %2990 = vsyncpa %s2989, 1

</llo_original>
